<compile_context>
chip_gen: v7x
topology: tpu7x:2x2x1
jax: 0.10.0
libtpu: 0.0.40
codegen_flags: <defaults>
</compile_context>

<pallas_src>
import jax
import jax.numpy as jnp
from jax.experimental import pallas as pl
from jax.experimental.pallas import tpu as pltpu


def conv3x3_relu_kernel(x_ref, w_ref, b_ref, o_ref):
    """One (batch, row-tile) grid step of ReLU(conv3x3(x) + b).

    x_ref: (1, TH+2, W+2, Cin)   input rows incl. 2-row halo (NHWC)
    w_ref: (9*Cin, Cout_p)       3x3 weights folded for a single matmul
    b_ref: (1, Cout_p)           bias (f32)
    o_ref: (1, TH, W, Cout_p)    output rows (NHWC, lane-dense channels)
    """
    _, th, w, cout_p = o_ref.shape
    cin = x_ref.shape[-1]

    x = x_ref[0]                                       # (TH+2, W+2, Cin)

    # Build the three W-shifted planes once and reuse them for every dy tap
    # (3 sublane relayouts instead of 9).
    x_shift = [x[:, dx:dx + w, :] for dx in range(3)]

    # im2col patch matrix (TH*W, 9*Cin); dy slices are along a major
    # (untiled) dim -> base-offset change only, no relayout.
    parts = []
    for dy in range(3):
        for dx in range(3):
            parts.append(x_shift[dx][dy:dy + th, :, :])
    patches = jnp.concatenate(parts, axis=-1).reshape(th * w, 9 * cin)

    # Single MXU matmul over the fused contraction K = 9*Cin, f32 accumulate.
    acc = jnp.dot(patches, w_ref[...], preferred_element_type=jnp.float32)
    # Bias + ReLU kept in f32 (v5e VPU/EUP have no bf16 path).
    acc = jnp.maximum(acc + b_ref[...], 0.0)
    o_ref[...] = acc.reshape(1, th, w, cout_p).astype(o_ref.dtype)


def _auto_row_tile(h, w, cin, cout_p, itemsize, budget_bytes=12 * 1024 * 1024):
    """Largest divisor of `h` whose double-buffered tiles fit the VMEM budget
    (kept well below v7x's 64 MiB physical VMEM)."""
    def ceil_to(a, m):
        return -(-a // m) * m

    for th in range(min(h, 256), 0, -1):
        if h % th:
            continue
        in_tile = (th + 2) * ceil_to(w + 2, 8) * ceil_to(cin, 128) * itemsize
        out_tile = th * ceil_to(w, 8) * cout_p * 4
        scratch = th * w * (ceil_to(9 * cin, 128) * itemsize + cout_p * 4)
        if 2 * (in_tile + out_tile) + scratch <= budget_bytes:
            return th
    return 1


def convolution_forward(x_nchw, w_hwio, bias, *, row_tile=None,
                        compute_dtype=jnp.float32):
    """ReLU(conv2d 3x3, stride 1, pad 1). x_nchw: (N, Cin, H, W) -> (N, Cout, H, W)."""
    n, cin, h, w = x_nchw.shape
    kh, kw, wcin, cout = w_hwio.shape
    assert (kh, kw, wcin) == (3, 3, cin), "expected HWIO 3x3 weights"
    out_dtype = x_nchw.dtype
    cout_p = -(-cout // 128) * 128                 # lane-dense output channels
    hp, wp = h + 2, w + 2

    # TODO(synk): fold the NCHW->NHWC transpose + zero padding into the
    # BlockSpec/index_map (or accept NHWC producers) to drop this extra HBM
    # round-trip of the input before the kernel starts.
    x_nhwc = jnp.transpose(x_nchw, (0, 2, 3, 1)).astype(compute_dtype)
    x_pad = jnp.pad(x_nhwc, ((0, 0), (1, 1), (1, 1), (0, 0)))

    # Weights -> (9*Cin, Cout_p): all nine taps fuse into one matmul; Cout is
    # padded to a multiple of 128 so output stores are unmasked (sliced below).
    w_folded = jnp.pad(w_hwio, ((0, 0), (0, 0), (0, 0), (0, cout_p - cout)))
    w_folded = w_folded.reshape(9 * cin, cout_p).astype(compute_dtype)
    b_folded = jnp.pad(bias, (0, cout_p - cout)).reshape(1, cout_p)
    b_folded = b_folded.astype(jnp.float32)

    itemsize = jnp.dtype(compute_dtype).itemsize
    if row_tile is None:
        th = _auto_row_tile(h, w, cin, cout_p, itemsize)
    else:
        th = max(1, min(int(row_tile), h))
        while h % th:
            th -= 1

    cost = pl.CostEstimate(
        flops=2 * n * h * w * 9 * cin * cout_p,
        transcendentals=0,
        bytes_accessed=int(x_pad.size) * itemsize
        + int(w_folded.size) * itemsize + int(b_folded.size) * 4
        + n * h * w * cout_p * jnp.dtype(out_dtype).itemsize,
    )

    def _launch(row_block):
        n_row_tiles = h // row_block
        if n_row_tiles == 1:
            # Whole (padded) image height per step: plain blocked window.
            x_spec = pl.BlockSpec((1, hp, wp, cin),
                                  lambda ni, hi: (ni, 0, 0, 0))
        else:
            # Overlapping row windows (2-row halo): element-indexed H dim;
            # consecutive windows start row_block rows apart but are
            # row_block + 2 rows tall.
            x_spec = pl.BlockSpec((1, pl.Element(row_block + 2), wp, cin),
                                  lambda ni, hi: (ni, hi * row_block, 0, 0))
        return pl.pallas_call(
            conv3x3_relu_kernel,
            out_shape=jax.ShapeDtypeStruct((n, h, w, cout_p), out_dtype),
            grid=(n, n_row_tiles),
            in_specs=[
                x_spec,
                pl.BlockSpec((9 * cin, cout_p), lambda ni, hi: (0, 0)),
                pl.BlockSpec((1, cout_p), lambda ni, hi: (0, 0)),
            ],
            out_specs=pl.BlockSpec((1, row_block, w, cout_p),
                                   lambda ni, hi: (ni, hi, 0, 0)),
            compiler_params=pltpu.CompilerParams(
                dimension_semantics=("parallel", "parallel"),
                vmem_limit_bytes=32 * 1024 * 1024,
            ),
            cost_estimate=cost,
        )(x_pad, w_folded, b_folded)

    if h // th > 1:
        try:
            out_nhwc = _launch(th)
        except Exception:
            # Element-indexed (halo) BlockSpecs unavailable in this jax build:
            # fall back to whole-height row blocks (still batch-pipelined and
            # parallel over the batch axis).
            out_nhwc = _launch(h)
    else:
        out_nhwc = _launch(th)

    out_nhwc = out_nhwc[..., :cout]                # drop channel padding lanes
    return jnp.transpose(out_nhwc, (0, 3, 1, 2))   # back to NCHW


if __name__ == "__main__":
    key = jax.random.PRNGKey(0)
    k_x, k_w, k_b = jax.random.split(key, 3)

    N, C_IN, H, W = 2, 4, 16, 16
    C_OUT = 8

    x = jax.random.normal(k_x, (N, C_IN, H, W), dtype=jnp.float32)

    # Deterministic parameters mimicking nn.Conv2d default init
    # (uniform in +/- 1/sqrt(fan_in)), stored directly in HWIO layout.
    fan_in = C_IN * 3 * 3
    bound = 1.0 / (fan_in ** 0.5)
    w_hwio = jax.random.uniform(k_w, (3, 3, C_IN, C_OUT),
                                minval=-bound, maxval=bound, dtype=jnp.float32)
    bias = jax.random.uniform(k_b, (C_OUT,),
                              minval=-bound, maxval=bound, dtype=jnp.float32)

    # Reference: XLA conv + bias + ReLU.
    w_oihw = jnp.transpose(w_hwio, (3, 2, 0, 1))
    ref = jax.lax.conv_general_dilated(
        x, w_oihw, window_strides=(1, 1), padding="SAME",
        dimension_numbers=("NCHW", "OIHW", "NCHW"))
    ref = jnp.maximum(ref + bias[None, :, None, None], 0.0)

    # f32 path, two overlapping row tiles per image (exercises the halo grid).
    out = convolution_forward(x, w_hwio, bias, row_tile=8)
    out = jax.block_until_ready(out)
    assert out.shape == (N, C_OUT, H, W)
    assert jnp.allclose(out, ref, atol=1e-3, rtol=1e-3)

    # bf16 MXU path (v6e/v7x), auto row tile, f32 accumulate/epilogue.
    out_bf16 = convolution_forward(x, w_hwio, bias, compute_dtype=jnp.bfloat16)
    out_bf16 = jax.block_until_ready(out_bf16)
    assert jnp.allclose(out_bf16, ref, atol=5e-2, rtol=5e-2)

    print("KERNEL_OK")
</pallas_src>

<mosaic_0001>
module attributes {stable_mosaic.version = 11 : i64} {
  func.func @conv3x3_relu_kernel(%arg0: i32, %arg1: i32, %arg2: memref<1x18x18x4xf32, #tpu.memory_space<vmem>>, %arg3: memref<36x128xf32, #tpu.memory_space<vmem>>, %arg4: memref<1x128xf32, #tpu.memory_space<vmem>>, %arg5: memref<1x16x16x128xf32, #tpu.memory_space<vmem>>) attributes {dimension_semantics = [#tpu.dimension_semantics<parallel>, #tpu.dimension_semantics<parallel>], iteration_bounds = array<i64: 2, 1>, scalar_prefetch = 0 : i64, scratch_operands = 0 : i64, tpu.core_type = #tpu.core_type<tc>, window_params = [{transform_indices = @transform_0, window_bounds = array<i64: 1, 18, 18, 4>}, {pipeline_mode = #tpu.pipeline_mode<synchronous>, transform_indices = @transform_1, window_bounds = array<i64: 36, 128>}, {pipeline_mode = #tpu.pipeline_mode<synchronous>, transform_indices = @transform_2, window_bounds = array<i64: 1, 128>}, {transform_indices = @transform_3, window_bounds = array<i64: 1, 16, 16, 128>}]} {
    %c0 = arith.constant 0 : index
    %c0_0 = arith.constant 0 : index
    %c0_1 = arith.constant 0 : index
    %c0_2 = arith.constant 0 : index
    %0 = vector.load %arg2[%c0, %c0_0, %c0_1, %c0_2] : memref<1x18x18x4xf32, #tpu.memory_space<vmem>>, vector<1x18x18x4xf32>
    %1 = vector.shape_cast %0 : vector<1x18x18x4xf32> to vector<18x18x4xf32>
    %2 = vector.extract_strided_slice %1 {offsets = [0, 0, 0], sizes = [18, 16, 4], strides = [1, 1, 1]} : vector<18x18x4xf32> to vector<18x16x4xf32>
    %3 = vector.extract_strided_slice %1 {offsets = [0, 1, 0], sizes = [18, 16, 4], strides = [1, 1, 1]} : vector<18x18x4xf32> to vector<18x16x4xf32>
    %4 = vector.extract_strided_slice %1 {offsets = [0, 2, 0], sizes = [18, 16, 4], strides = [1, 1, 1]} : vector<18x18x4xf32> to vector<18x16x4xf32>
    %5 = vector.extract_strided_slice %2 {offsets = [0, 0, 0], sizes = [16, 16, 4], strides = [1, 1, 1]} : vector<18x16x4xf32> to vector<16x16x4xf32>
    %6 = vector.extract_strided_slice %3 {offsets = [0, 0, 0], sizes = [16, 16, 4], strides = [1, 1, 1]} : vector<18x16x4xf32> to vector<16x16x4xf32>
    %7 = vector.extract_strided_slice %4 {offsets = [0, 0, 0], sizes = [16, 16, 4], strides = [1, 1, 1]} : vector<18x16x4xf32> to vector<16x16x4xf32>
    %8 = vector.extract_strided_slice %2 {offsets = [1, 0, 0], sizes = [16, 16, 4], strides = [1, 1, 1]} : vector<18x16x4xf32> to vector<16x16x4xf32>
    %9 = vector.extract_strided_slice %3 {offsets = [1, 0, 0], sizes = [16, 16, 4], strides = [1, 1, 1]} : vector<18x16x4xf32> to vector<16x16x4xf32>
    %10 = vector.extract_strided_slice %4 {offsets = [1, 0, 0], sizes = [16, 16, 4], strides = [1, 1, 1]} : vector<18x16x4xf32> to vector<16x16x4xf32>
    %11 = vector.extract_strided_slice %2 {offsets = [2, 0, 0], sizes = [16, 16, 4], strides = [1, 1, 1]} : vector<18x16x4xf32> to vector<16x16x4xf32>
    %12 = vector.extract_strided_slice %3 {offsets = [2, 0, 0], sizes = [16, 16, 4], strides = [1, 1, 1]} : vector<18x16x4xf32> to vector<16x16x4xf32>
    %13 = vector.extract_strided_slice %4 {offsets = [2, 0, 0], sizes = [16, 16, 4], strides = [1, 1, 1]} : vector<18x16x4xf32> to vector<16x16x4xf32>
    %14 = tpu.concatenate %5, %6, %7, %8, %9, %10, %11, %12, %13 in 2 : vector<16x16x4xf32>, vector<16x16x4xf32>, vector<16x16x4xf32>, vector<16x16x4xf32>, vector<16x16x4xf32>, vector<16x16x4xf32>, vector<16x16x4xf32>, vector<16x16x4xf32>, vector<16x16x4xf32> -> vector<16x16x36xf32>
    %15 = vector.shape_cast %14 : vector<16x16x36xf32> to vector<256x36xf32>
    %c0_3 = arith.constant 0 : index
    %c0_4 = arith.constant 0 : index
    %16 = vector.load %arg3[%c0_3, %c0_4] : memref<36x128xf32, #tpu.memory_space<vmem>>, vector<36x128xf32>
    %cst = arith.constant dense<0.000000e+00> : vector<256x128xf32>
    %17 = tpu.matmul %15, %16, %cst {dimension_numbers = #tpu.dot_dimension_numbers<[1], [0], [0], [1], [0, 0, 1, 1], [], []>} : vector<256x36xf32>, vector<36x128xf32>, vector<256x128xf32> -> vector<256x128xf32>
    %c0_5 = arith.constant 0 : index
    %c0_6 = arith.constant 0 : index
    %18 = vector.load %arg4[%c0_5, %c0_6] : memref<1x128xf32, #tpu.memory_space<vmem>>, vector<1x128xf32>
    %19 = vector.broadcast %18 : vector<1x128xf32> to vector<256x128xf32>
    %20 = arith.addf %17, %19 : vector<256x128xf32>
    %cst_7 = arith.constant 0.000000e+00 : f32
    %21 = vector.broadcast %cst_7 : f32 to vector<256x128xf32>
    %22 = arith.maximumf %20, %21 : vector<256x128xf32>
    %23 = vector.shape_cast %22 : vector<256x128xf32> to vector<1x16x16x128xf32>
    %c0_8 = arith.constant 0 : index
    %c0_9 = arith.constant 0 : index
    %c0_10 = arith.constant 0 : index
    %c0_11 = arith.constant 0 : index
    %24 = vector.load %arg5[%c0_8, %c0_9, %c0_10, %c0_11] : memref<1x16x16x128xf32, #tpu.memory_space<vmem>>, vector<1x16x16x128xf32>
    tpu.vector_store %arg5[%c0_8, %c0_9, %c0_10, %c0_11], %23 {strides = array<i32>} : memref<1x16x16x128xf32, #tpu.memory_space<vmem>>, vector<1x16x16x128xf32>,
    return
  }
  func.func @transform_0(%arg0: i32, %arg1: i32) -> (i32, i32, i32, i32) {
    %c0_i32 = arith.constant 0 : i32
    %c0_i32_0 = arith.constant 0 : i32
    %c0_i32_1 = arith.constant 0 : i32
    %c0_i32_2 = arith.constant 0 : i32
    return %arg0, %c0_i32, %c0_i32_0, %c0_i32_1 : i32, i32, i32, i32
  }
  func.func @transform_1(%arg0: i32, %arg1: i32) -> (i32, i32) {
    %c0_i32 = arith.constant 0 : i32
    %c0_i32_0 = arith.constant 0 : i32
    %c0_i32_1 = arith.constant 0 : i32
    return %c0_i32, %c0_i32_0 : i32, i32
  }
  func.func @transform_2(%arg0: i32, %arg1: i32) -> (i32, i32) {
    %c0_i32 = arith.constant 0 : i32
    %c0_i32_0 = arith.constant 0 : i32
    %c0_i32_1 = arith.constant 0 : i32
    return %c0_i32, %c0_i32_0 : i32, i32
  }
  func.func @transform_3(%arg0: i32, %arg1: i32) -> (i32, i32, i32, i32) {
    %c0_i32 = arith.constant 0 : i32
    %c0_i32_0 = arith.constant 0 : i32
    %c0_i32_1 = arith.constant 0 : i32
    return %arg0, %arg1, %c0_i32, %c0_i32_0 : i32, i32, i32, i32
  }
}

</mosaic_0001>

<llo_original>
// kernel: tpu_custom_call.1
$region0: #{tpu_custom_call.1}
  #allocation0 [shape = 'u32[]', space=smem, size = 0x4, offset = 0x4, fixed_abs, tag = 'smem constant byte address 0x4 - core index']
  #allocation1 [shape = 'u32[144,128]{1,0:T(1,128)}', space=vmem, size = 0x12000, scoped, tag = 'internal scratch']
  %s0 = inlined_call_operand.vmem [shape: f32[2,18,18,4], index: 0, kind: input, shape index: {}]
  %s1 = inlined_call_operand.vmem [shape: f32[36,128], index: 1, kind: input, shape index: {}]
  %s2 = inlined_call_operand.vmem [shape: f32[1,128], index: 2, kind: input, shape index: {}]
  %s3 = inlined_call_operand.hbm [shape: f32[2,16,16,128], index: 3, kind: output, shape index: {}]
  %s4 = sld [smem:[#allocation0]]
  $region45: #{tpu_custom_call.1} parent=0
    _
  %s6 = ssub.s32 1, %s4
  %s7 = scalar_select 0, %s6, %s4
  $region1: #{tpu_custom_call.1} parent=0
    #allocation2 [shape = 'u8[262144]{0}', space=vmem, size = 0x40000, scoped, tag = 'output window, operand 0']
    #allocation3 [shape = 's32[2]{0}', space=sflag, size = 0x8, scoped, tag = 'scoped memory for tpu_custom_call.1']
    %8 = vsyncpa [#allocation3], 0
    %s9 = scalar_lea.sflag [#allocation3], 1
    %10 = vsyncpa %s9, 0
    loop: start=0, step=1, limit=4
    $region2: #{tpu_custom_call.1} parent=1 // loop_pre_header
      _
    $region3: #{tpu_custom_call.1} parent=1 // loop_header
      %s12 = sphi 0, %s16
      %p13 = scmp.ge.s32.totalorder %s12, 4
      %s19 = sphi 0, %s31
      %s20 = sphi 0, %s27
      %s21 = sphi 0, %s19
      %s22 = sphi 0, %s20
      %s23 = sphi 0, %s21
      %s24 = sphi 0, %s22
      %s34 = sphi 0, %s36
      %s37 = sphi 0, %s34
      %s38 = sphi 0, %s37
      %s54 = sphi 0, %s38
      %s58 = sphi 0, %s58
      %s60 = sphi 0, %s58
      %s61 = sphi 0, %s60
      %s75 = sphi 0, %s61
      %s79 = sphi 0, %s79
      %s81 = sphi 0, %s79
      %s82 = sphi 0, %s81
      %s96 = sphi 0, %s82
      %s104 = sphi 0, %s106
      %s107 = sphi 0, %s104
      %s108 = sphi 0, %s107
      %s124 = sphi 0, %s108
    $region4: #{tpu_custom_call.1} parent=1 // loop_header_branch
      %15 = sbr.rel (%p13) target = $region8
    $region5: #{tpu_custom_call.1} parent=1 // loop_body
      %s17 = ssub.s32 %s12, 1
      %s18 = ssub.s32 %s12, 2
      %s25 = sadd.s32 1, %s20
      %p26 = scmp.ge.s32.totalorder %s25, 1
      %s27 = scalar_select %p26, 0, %s25
      %s28 = sadd.s32 1, %s19
      %s29 = scalar_select %p26, %s28, %s19
      %p30 = scmp.ge.s32.totalorder %s29, 2
      %s31 = scalar_select %p30, 0, %s29
      %s32 = ssub.s32 %s19, %s31
      %p33 = scmp.eq.s32.totalorder %s32, 0
      %s35 = sadd.s32 %s34, 1
      %s36 = scalar_select %p33, %s34, %s35
      %p39 = pneg %p33
      %p40 = scmp.eq.s32.totalorder %s12, 1
      %p41 = por %p39, %p40
      %p42 = scmp.ne.s32.totalorder %s34, %s37
      %p43 = scmp.eq.s32.totalorder %s12, 0
      %p44 = por %p42, %p43
      %p45 = scmp.ne.s32.totalorder %s34, %s37
      %p46 = scmp.eq.s32.totalorder %s17, 1
      %p47 = por %p45, %p46
      %p48 = scmp.ne.s32.totalorder %s37, %s38
      %p49 = scmp.eq.s32.totalorder %s17, 0
      %p50 = por %p48, %p49
      %p51 = scmp.ne.s32.totalorder %s37, %s38
      %p52 = scmp.eq.s32.totalorder %s18, 1
      %p53 = por %p51, %p52
      %p55 = scmp.ne.s32.totalorder %s38, %s54
      %p56 = scmp.eq.s32.totalorder %s18, 0
      %p57 = por %p55, %p56
      %s59 = sadd.s32 %s58, 1
      %p62 = scmp.eq.s32.totalorder %s12, 1
      %p63 = scmp.ne.s32.totalorder %s58, %s60
      %p64 = scmp.eq.s32.totalorder %s12, 0
      %p65 = por %p63, %p64
      %p66 = scmp.ne.s32.totalorder %s58, %s60
      %p67 = scmp.eq.s32.totalorder %s17, 1
      %p68 = por %p66, %p67
      %p69 = scmp.ne.s32.totalorder %s60, %s61
      %p70 = scmp.eq.s32.totalorder %s17, 0
      %p71 = por %p69, %p70
      %p72 = scmp.ne.s32.totalorder %s60, %s61
      %p73 = scmp.eq.s32.totalorder %s18, 1
      %p74 = por %p72, %p73
      %p76 = scmp.ne.s32.totalorder %s61, %s75
      %p77 = scmp.eq.s32.totalorder %s18, 0
      %p78 = por %p76, %p77
      %s80 = sadd.s32 %s79, 1
      %p83 = scmp.eq.s32.totalorder %s12, 1
      %p84 = scmp.ne.s32.totalorder %s79, %s81
      %p85 = scmp.eq.s32.totalorder %s12, 0
      %p86 = por %p84, %p85
      %p87 = scmp.ne.s32.totalorder %s79, %s81
      %p88 = scmp.eq.s32.totalorder %s17, 1
      %p89 = por %p87, %p88
      %p90 = scmp.ne.s32.totalorder %s81, %s82
      %p91 = scmp.eq.s32.totalorder %s17, 0
      %p92 = por %p90, %p91
      %p93 = scmp.ne.s32.totalorder %s81, %s82
      %p94 = scmp.eq.s32.totalorder %s18, 1
      %p95 = por %p93, %p94
      %p97 = scmp.ne.s32.totalorder %s82, %s96
      %p98 = scmp.eq.s32.totalorder %s18, 0
      %p99 = por %p97, %p98
      %s100 = ssub.s32 %s19, %s31
      %s101 = ssub.s32 %s20, %s27
      %s102 = sor.u32 %s100, %s101
      %p103 = scmp.eq.s32.totalorder %s102, 0
      %s105 = sadd.s32 %s104, 1
      %s106 = scalar_select %p103, %s104, %s105
      %p109 = pneg %p103
      %p110 = scmp.eq.s32.totalorder %s12, 1
      %p111 = por %p109, %p110
      %p112 = scmp.ne.s32.totalorder %s104, %s107
      %p113 = scmp.eq.s32.totalorder %s12, 0
      %p114 = por %p112, %p113
      %p115 = scmp.ne.s32.totalorder %s104, %s107
      %p116 = scmp.eq.s32.totalorder %s17, 1
      %p117 = por %p115, %p116
      %p118 = scmp.ne.s32.totalorder %s107, %s108
      %p119 = scmp.eq.s32.totalorder %s17, 0
      %p120 = por %p118, %p119
      %p121 = scmp.ne.s32.totalorder %s107, %s108
      %p122 = scmp.eq.s32.totalorder %s18, 1
      %p123 = por %p121, %p122
      %p125 = scmp.ne.s32.totalorder %s108, %s124
      %p126 = scmp.eq.s32.totalorder %s18, 0
      %p127 = por %p125, %p126
      %p128 = scmp.le.s32.totalorder 1, %s12
      %p129 = scmp.lt.s32.totalorder %s12, 3
      %p130 = pnand %p128, %p129
      %p131 = pneg %p130
      // Predicated region
      $region9: #{tpu_custom_call.1} parent=5 // pred_check
        _
      $region10: #{tpu_custom_call.1} parent=5 // pred_check_branch
        %133 = sbr.rel (%p130) target = $region12
      $region11: #{tpu_custom_call.1} parent=5 // pred_region
        %s134 = ssub.s32 %s12, 1
        // Predicated region
        $region13: #{tpu_custom_call.1} parent=11 // pred_check
          %p135 = pneg %p71
        $region14: #{tpu_custom_call.1} parent=11 // pred_check_branch
          %137 = sbr.rel (%p135) target = $region16
        $region15: #{tpu_custom_call.1} parent=11 // pred_region
          _
        $region16: #{tpu_custom_call.1} parent=11 // pred_fallthru
          _
        // Predicated region
        $region17: #{tpu_custom_call.1} parent=11 // pred_check
          %p138 = pneg %p92
        $region18: #{tpu_custom_call.1} parent=11 // pred_check_branch
          %140 = sbr.rel (%p138) target = $region20
        $region19: #{tpu_custom_call.1} parent=11 // pred_region
          _
        $region20: #{tpu_custom_call.1} parent=11 // pred_fallthru
          _
      $region12: #{tpu_custom_call.1} parent=5 // pred_fallthru
        _
      %p141 = scmp.lt.s32.totalorder %s12, 2
      // Predicated region
      $region21: #{tpu_custom_call.1} parent=5 // pred_check
        %p142 = pneg %p141
      $region22: #{tpu_custom_call.1} parent=5 // pred_check_branch
        %144 = sbr.rel (%p142) target = $region24
      $region23: #{tpu_custom_call.1} parent=5 // pred_region
        // Predicated region
        $region25: #{tpu_custom_call.1} parent=23 // pred_check
          %p145 = pneg %p44
        $region26: #{tpu_custom_call.1} parent=23 // pred_check_branch
          %147 = sbr.rel (%p145) target = $region28
        $region27: #{tpu_custom_call.1} parent=23 // pred_region
          %p148 = scmp.lt.s32.totalorder %s19, 1
          %s149 = scalar_select %p148, %s19, 1
          %s150 = smul.addr %s149, 54
          %s151 = smul.addr %s150, 8
          %s152 = scalar_lea.vmem %s0, %s151
        $region28: #{tpu_custom_call.1} parent=23 // pred_fallthru
          _
      $region24: #{tpu_custom_call.1} parent=5 // pred_fallthru
        _
      %p153 = scmp.le.s32.totalorder 1, %s12
      %p154 = scmp.lt.s32.totalorder %s12, 3
      %p155 = pnand %p153, %p154
      %p156 = pneg %p155
      // Predicated region
      $region29: #{tpu_custom_call.1} parent=5 // pred_check
        _
      $region30: #{tpu_custom_call.1} parent=5 // pred_check_branch
        %158 = sbr.rel (%p155) target = $region32
      $region31: #{tpu_custom_call.1} parent=5 // pred_region
        %s159 = ssub.s32 %s12, 1
        %p160 = scmp.lt.s32.totalorder %s21, 1
        %s161 = scalar_select %p160, %s21, 1
        %s162 = smul.addr %s161, 54
        %s163 = smul.addr %s162, 8
        %s164 = scalar_lea.vmem %s0, %s163
        %p165 = pneg %p50
        %p166 = pneg %p47
        %p167 = pneg %p71
        %p168 = pneg %p68
        %p169 = pneg %p92
        %p170 = pneg %p89
        %p171 = pneg %p120
        %p172 = pneg %p117
        %s173 = sand.u32 %s107, 1
        %s174 = scalar_lea.sflag [#allocation3], %s173
        %s175 = sand.u32 %s107, 1
        %s176 = smul.addr %s175, 256
        %s177 = scalar_lea.vmem [#allocation2], %s176
        %p178 = scmp.lt.s32.totalorder %s21, 1
        %s179 = scalar_select %p178, %s21, 1
        %s180 = smul.addr %s179, 54
        %s181 = smul.addr %s180, 8
        %s182 = scalar_lea.vmem %s0, %s181
        %s183 = smul.u32 16, %s22
        %v184 = vld [vmem:[%s182] sm:$0xff]
        %v185 = vld [vmem:[%s182 + $0x8] sm:$0xff]
        %v186 = vld [vmem:[%s182 + $0x10] sm:$0x3]
        %v187 = vld [vmem:[%s182 + $0x18] sm:$0xff]
        %v188 = vld [vmem:[%s182 + $0x20] sm:$0xff]
        %v189 = vld [vmem:[%s182 + $0x28] sm:$0x3]
        %v190 = vld [vmem:[%s182 + $0x30] sm:$0xff]
        %v191 = vld [vmem:[%s182 + $0x38] sm:$0xff]
        %v192 = vld [vmem:[%s182 + $0x40] sm:$0x3]
        %v193 = vld [vmem:[%s182 + $0x48] sm:$0xff]
        %v194 = vld [vmem:[%s182 + $0x50] sm:$0xff]
        %v195 = vld [vmem:[%s182 + $0x58] sm:$0x3]
        %v196 = vld [vmem:[%s182 + $0x60] sm:$0xff]
        %v197 = vld [vmem:[%s182 + $0x68] sm:$0xff]
        %v198 = vld [vmem:[%s182 + $0x70] sm:$0x3]
        %v199 = vld [vmem:[%s182 + $0x78] sm:$0xff]
        %v200 = vld [vmem:[%s182 + $0x80] sm:$0xff]
        %v201 = vld [vmem:[%s182 + $0x88] sm:$0x3]
        %v202 = vld [vmem:[%s182 + $0x90] sm:$0xff]
        %v203 = vld [vmem:[%s182 + $0x98] sm:$0xff]
        %v204 = vld [vmem:[%s182 + $0xa0] sm:$0x3]
        %v205 = vld [vmem:[%s182 + $0xa8] sm:$0xff]
        %v206 = vld [vmem:[%s182 + $0xb0] sm:$0xff]
        %v207 = vld [vmem:[%s182 + $0xb8] sm:$0x3]
        %v208 = vld [vmem:[%s182 + $0xc0] sm:$0xff]
        %v209 = vld [vmem:[%s182 + $0xc8] sm:$0xff]
        %v210 = vld [vmem:[%s182 + $0xd0] sm:$0x3]
        %v211 = vld [vmem:[%s182 + $0xd8] sm:$0xff]
        %v212 = vld [vmem:[%s182 + $0xe0] sm:$0xff]
        %v213 = vld [vmem:[%s182 + $0xe8] sm:$0x3]
        %v214 = vld [vmem:[%s182 + $0xf0] sm:$0xff]
        %v215 = vld [vmem:[%s182 + $0xf8] sm:$0xff]
        %v216 = vld [vmem:[%s182 + $0x100] sm:$0x3]
        %v217 = vld [vmem:[%s182 + $0x108] sm:$0xff]
        %v218 = vld [vmem:[%s182 + $0x110] sm:$0xff]
        %v219 = vld [vmem:[%s182 + $0x118] sm:$0x3]
        %v220 = vld [vmem:[%s182 + $0x120] sm:$0xff]
        %v221 = vld [vmem:[%s182 + $0x128] sm:$0xff]
        %v222 = vld [vmem:[%s182 + $0x130] sm:$0x3]
        %v223 = vld [vmem:[%s182 + $0x138] sm:$0xff]
        %v224 = vld [vmem:[%s182 + $0x140] sm:$0xff]
        %v225 = vld [vmem:[%s182 + $0x148] sm:$0x3]
        %v226 = vld [vmem:[%s182 + $0x150] sm:$0xff]
        %v227 = vld [vmem:[%s182 + $0x158] sm:$0xff]
        %v228 = vld [vmem:[%s182 + $0x160] sm:$0x3]
        %v229 = vld [vmem:[%s182 + $0x168] sm:$0xff]
        %v230 = vld [vmem:[%s182 + $0x170] sm:$0xff]
        %v231 = vld [vmem:[%s182 + $0x178] sm:$0x3]
        %v232 = vld [vmem:[%s182 + $0x180] sm:$0xff]
        %v233 = vld [vmem:[%s182 + $0x188] sm:$0xff]
        %v234 = vld [vmem:[%s182 + $0x190] sm:$0x3]
        %v235 = vld [vmem:[%s182 + $0x198] sm:$0xff]
        %v236 = vld [vmem:[%s182 + $0x1a0] sm:$0xff]
        %v237 = vld [vmem:[%s182 + $0x1a8] sm:$0x3]
        %vm286 = vcmask 1046528
        %v287 = vrot.slane %v184, 1
        %v288 = vrot.slane %v185, 1
        %v289 = vsel %vm286, %v287, %v288
        %v290 = vrot.slane %v186, 1
        %v291 = vsel %vm286, %v288, %v290
        %v292 = vrot.slane %v187, 1
        %v293 = vrot.slane %v188, 1
        %v294 = vsel %vm286, %v292, %v293
        %v295 = vrot.slane %v189, 1
        %v296 = vsel %vm286, %v293, %v295
        %v297 = vrot.slane %v190, 1
        %v298 = vrot.slane %v191, 1
        %v299 = vsel %vm286, %v297, %v298
        %v300 = vrot.slane %v192, 1
        %v301 = vsel %vm286, %v298, %v300
        %v302 = vrot.slane %v193, 1
        %v303 = vrot.slane %v194, 1
        %v304 = vsel %vm286, %v302, %v303
        %v305 = vrot.slane %v195, 1
        %v306 = vsel %vm286, %v303, %v305
        %v307 = vrot.slane %v196, 1
        %v308 = vrot.slane %v197, 1
        %v309 = vsel %vm286, %v307, %v308
        %v310 = vrot.slane %v198, 1
        %v311 = vsel %vm286, %v308, %v310
        %v312 = vrot.slane %v199, 1
        %v313 = vrot.slane %v200, 1
        %v314 = vsel %vm286, %v312, %v313
        %v315 = vrot.slane %v201, 1
        %v316 = vsel %vm286, %v313, %v315
        %v317 = vrot.slane %v202, 1
        %v318 = vrot.slane %v203, 1
        %v319 = vsel %vm286, %v317, %v318
        %v320 = vrot.slane %v204, 1
        %v321 = vsel %vm286, %v318, %v320
        %v322 = vrot.slane %v205, 1
        %v323 = vrot.slane %v206, 1
        %v324 = vsel %vm286, %v322, %v323
        %v325 = vrot.slane %v207, 1
        %v326 = vsel %vm286, %v323, %v325
        %v327 = vrot.slane %v208, 1
        %v328 = vrot.slane %v209, 1
        %v329 = vsel %vm286, %v327, %v328
        %v330 = vrot.slane %v210, 1
        %v331 = vsel %vm286, %v328, %v330
        %v332 = vrot.slane %v211, 1
        %v333 = vrot.slane %v212, 1
        %v334 = vsel %vm286, %v332, %v333
        %v335 = vrot.slane %v213, 1
        %v336 = vsel %vm286, %v333, %v335
        %v337 = vrot.slane %v214, 1
        %v338 = vrot.slane %v215, 1
        %v339 = vsel %vm286, %v337, %v338
        %v340 = vrot.slane %v216, 1
        %v341 = vsel %vm286, %v338, %v340
        %v342 = vrot.slane %v217, 1
        %v343 = vrot.slane %v218, 1
        %v344 = vsel %vm286, %v342, %v343
        %v345 = vrot.slane %v219, 1
        %v346 = vsel %vm286, %v343, %v345
        %v347 = vrot.slane %v220, 1
        %v348 = vrot.slane %v221, 1
        %v349 = vsel %vm286, %v347, %v348
        %v350 = vrot.slane %v222, 1
        %v351 = vsel %vm286, %v348, %v350
        %v352 = vrot.slane %v223, 1
        %v353 = vrot.slane %v224, 1
        %v354 = vsel %vm286, %v352, %v353
        %v355 = vrot.slane %v225, 1
        %v356 = vsel %vm286, %v353, %v355
        %v357 = vrot.slane %v226, 1
        %v358 = vrot.slane %v227, 1
        %v359 = vsel %vm286, %v357, %v358
        %v360 = vrot.slane %v228, 1
        %v361 = vsel %vm286, %v358, %v360
        %v362 = vrot.slane %v229, 1
        %v363 = vrot.slane %v230, 1
        %v364 = vsel %vm286, %v362, %v363
        %v365 = vrot.slane %v231, 1
        %v366 = vsel %vm286, %v363, %v365
        %367 = vrot.lane.b32.xlu0 %v289, 4
        %v368 = vpop.permute.xlu0 %367
        %369 = vrot.lane.b32.xlu0 %v291, 4
        %v370 = vpop.permute.xlu0 %369
        %371 = vrot.lane.b32.xlu0 %v294, 4
        %v372 = vpop.permute.xlu0 %371
        %373 = vrot.lane.b32.xlu0 %v296, 4
        %v374 = vpop.permute.xlu0 %373
        %375 = vrot.lane.b32.xlu0 %v299, 4
        %v376 = vpop.permute.xlu0 %375
        %377 = vrot.lane.b32.xlu0 %v301, 4
        %v378 = vpop.permute.xlu0 %377
        %379 = vrot.lane.b32.xlu0 %v304, 4
        %v380 = vpop.permute.xlu0 %379
        %381 = vrot.lane.b32.xlu0 %v306, 4
        %v382 = vpop.permute.xlu0 %381
        %383 = vrot.lane.b32.xlu0 %v309, 4
        %v384 = vpop.permute.xlu0 %383
        %385 = vrot.lane.b32.xlu0 %v311, 4
        %v386 = vpop.permute.xlu0 %385
        %387 = vrot.lane.b32.xlu0 %v314, 4
        %v388 = vpop.permute.xlu0 %387
        %389 = vrot.lane.b32.xlu0 %v316, 4
        %v390 = vpop.permute.xlu0 %389
        %391 = vrot.lane.b32.xlu0 %v319, 4
        %v392 = vpop.permute.xlu0 %391
        %393 = vrot.lane.b32.xlu0 %v321, 4
        %v394 = vpop.permute.xlu0 %393
        %395 = vrot.lane.b32.xlu0 %v324, 4
        %v396 = vpop.permute.xlu0 %395
        %397 = vrot.lane.b32.xlu0 %v326, 4
        %v398 = vpop.permute.xlu0 %397
        %399 = vrot.lane.b32.xlu0 %v329, 4
        %v400 = vpop.permute.xlu0 %399
        %401 = vrot.lane.b32.xlu0 %v331, 4
        %v402 = vpop.permute.xlu0 %401
        %403 = vrot.lane.b32.xlu0 %v334, 4
        %v404 = vpop.permute.xlu0 %403
        %405 = vrot.lane.b32.xlu0 %v336, 4
        %v406 = vpop.permute.xlu0 %405
        %407 = vrot.lane.b32.xlu0 %v339, 4
        %v408 = vpop.permute.xlu0 %407
        %409 = vrot.lane.b32.xlu0 %v341, 4
        %v410 = vpop.permute.xlu0 %409
        %411 = vrot.lane.b32.xlu0 %v344, 4
        %v412 = vpop.permute.xlu0 %411
        %413 = vrot.lane.b32.xlu0 %v346, 4
        %v414 = vpop.permute.xlu0 %413
        %415 = vrot.lane.b32.xlu0 %v349, 4
        %v416 = vpop.permute.xlu0 %415
        %417 = vrot.lane.b32.xlu0 %v351, 4
        %v418 = vpop.permute.xlu0 %417
        %419 = vrot.lane.b32.xlu0 %v354, 4
        %v420 = vpop.permute.xlu0 %419
        %421 = vrot.lane.b32.xlu0 %v356, 4
        %v422 = vpop.permute.xlu0 %421
        %423 = vrot.lane.b32.xlu0 %v359, 4
        %v424 = vpop.permute.xlu0 %423
        %425 = vrot.lane.b32.xlu0 %v361, 4
        %v426 = vpop.permute.xlu0 %425
        %427 = vrot.lane.b32.xlu0 %v364, 4
        %v428 = vpop.permute.xlu0 %427
        %429 = vrot.lane.b32.xlu0 %v366, 4
        %v430 = vpop.permute.xlu0 %429
        %vm463 = vcmask 1045504
        %v464 = vrot.slane %v184, 2
        %v465 = vrot.slane %v185, 2
        %v466 = vsel %vm463, %v464, %v465
        %v467 = vrot.slane %v186, 2
        %v468 = vsel %vm463, %v465, %v467
        %v469 = vrot.slane %v187, 2
        %v470 = vrot.slane %v188, 2
        %v471 = vsel %vm463, %v469, %v470
        %v472 = vrot.slane %v189, 2
        %v473 = vsel %vm463, %v470, %v472
        %v474 = vrot.slane %v190, 2
        %v475 = vrot.slane %v191, 2
        %v476 = vsel %vm463, %v474, %v475
        %v477 = vrot.slane %v192, 2
        %v478 = vsel %vm463, %v475, %v477
        %v479 = vrot.slane %v193, 2
        %v480 = vrot.slane %v194, 2
        %v481 = vsel %vm463, %v479, %v480
        %v482 = vrot.slane %v195, 2
        %v483 = vsel %vm463, %v480, %v482
        %v484 = vrot.slane %v196, 2
        %v485 = vrot.slane %v197, 2
        %v486 = vsel %vm463, %v484, %v485
        %v487 = vrot.slane %v198, 2
        %v488 = vsel %vm463, %v485, %v487
        %v489 = vrot.slane %v199, 2
        %v490 = vrot.slane %v200, 2
        %v491 = vsel %vm463, %v489, %v490
        %v492 = vrot.slane %v201, 2
        %v493 = vsel %vm463, %v490, %v492
        %v494 = vrot.slane %v202, 2
        %v495 = vrot.slane %v203, 2
        %v496 = vsel %vm463, %v494, %v495
        %v497 = vrot.slane %v204, 2
        %v498 = vsel %vm463, %v495, %v497
        %v499 = vrot.slane %v205, 2
        %v500 = vrot.slane %v206, 2
        %v501 = vsel %vm463, %v499, %v500
        %v502 = vrot.slane %v207, 2
        %v503 = vsel %vm463, %v500, %v502
        %v504 = vrot.slane %v208, 2
        %v505 = vrot.slane %v209, 2
        %v506 = vsel %vm463, %v504, %v505
        %v507 = vrot.slane %v210, 2
        %v508 = vsel %vm463, %v505, %v507
        %v509 = vrot.slane %v211, 2
        %v510 = vrot.slane %v212, 2
        %v511 = vsel %vm463, %v509, %v510
        %v512 = vrot.slane %v213, 2
        %v513 = vsel %vm463, %v510, %v512
        %v514 = vrot.slane %v214, 2
        %v515 = vrot.slane %v215, 2
        %v516 = vsel %vm463, %v514, %v515
        %v517 = vrot.slane %v216, 2
        %v518 = vsel %vm463, %v515, %v517
        %v519 = vrot.slane %v217, 2
        %v520 = vrot.slane %v218, 2
        %v521 = vsel %vm463, %v519, %v520
        %v522 = vrot.slane %v219, 2
        %v523 = vsel %vm463, %v520, %v522
        %v524 = vrot.slane %v220, 2
        %v525 = vrot.slane %v221, 2
        %v526 = vsel %vm463, %v524, %v525
        %v527 = vrot.slane %v222, 2
        %v528 = vsel %vm463, %v525, %v527
        %v529 = vrot.slane %v223, 2
        %v530 = vrot.slane %v224, 2
        %v531 = vsel %vm463, %v529, %v530
        %v532 = vrot.slane %v225, 2
        %v533 = vsel %vm463, %v530, %v532
        %v534 = vrot.slane %v226, 2
        %v535 = vrot.slane %v227, 2
        %v536 = vsel %vm463, %v534, %v535
        %v537 = vrot.slane %v228, 2
        %v538 = vsel %vm463, %v535, %v537
        %v539 = vrot.slane %v229, 2
        %v540 = vrot.slane %v230, 2
        %v541 = vsel %vm463, %v539, %v540
        %v542 = vrot.slane %v231, 2
        %v543 = vsel %vm463, %v540, %v542
        %544 = vrot.lane.b32.xlu0 %v466, 8
        %v545 = vpop.permute.xlu0 %544
        %546 = vrot.lane.b32.xlu0 %v468, 8
        %v547 = vpop.permute.xlu0 %546
        %548 = vrot.lane.b32.xlu0 %v471, 8
        %v549 = vpop.permute.xlu0 %548
        %550 = vrot.lane.b32.xlu0 %v473, 8
        %v551 = vpop.permute.xlu0 %550
        %552 = vrot.lane.b32.xlu0 %v476, 8
        %v553 = vpop.permute.xlu0 %552
        %554 = vrot.lane.b32.xlu0 %v478, 8
        %v555 = vpop.permute.xlu0 %554
        %556 = vrot.lane.b32.xlu0 %v481, 8
        %v557 = vpop.permute.xlu0 %556
        %558 = vrot.lane.b32.xlu0 %v483, 8
        %v559 = vpop.permute.xlu0 %558
        %560 = vrot.lane.b32.xlu0 %v486, 8
        %v561 = vpop.permute.xlu0 %560
        %562 = vrot.lane.b32.xlu0 %v488, 8
        %v563 = vpop.permute.xlu0 %562
        %564 = vrot.lane.b32.xlu0 %v491, 8
        %v565 = vpop.permute.xlu0 %564
        %566 = vrot.lane.b32.xlu0 %v493, 8
        %v567 = vpop.permute.xlu0 %566
        %568 = vrot.lane.b32.xlu0 %v496, 8
        %v569 = vpop.permute.xlu0 %568
        %570 = vrot.lane.b32.xlu0 %v498, 8
        %v571 = vpop.permute.xlu0 %570
        %572 = vrot.lane.b32.xlu0 %v501, 8
        %v573 = vpop.permute.xlu0 %572
        %574 = vrot.lane.b32.xlu0 %v503, 8
        %v575 = vpop.permute.xlu0 %574
        %576 = vrot.lane.b32.xlu0 %v506, 8
        %v577 = vpop.permute.xlu0 %576
        %578 = vrot.lane.b32.xlu0 %v508, 8
        %v579 = vpop.permute.xlu0 %578
        %580 = vrot.lane.b32.xlu0 %v511, 8
        %v581 = vpop.permute.xlu0 %580
        %582 = vrot.lane.b32.xlu0 %v513, 8
        %v583 = vpop.permute.xlu0 %582
        %584 = vrot.lane.b32.xlu0 %v516, 8
        %v585 = vpop.permute.xlu0 %584
        %586 = vrot.lane.b32.xlu0 %v518, 8
        %v587 = vpop.permute.xlu0 %586
        %588 = vrot.lane.b32.xlu0 %v521, 8
        %v589 = vpop.permute.xlu0 %588
        %590 = vrot.lane.b32.xlu0 %v523, 8
        %v591 = vpop.permute.xlu0 %590
        %592 = vrot.lane.b32.xlu0 %v526, 8
        %v593 = vpop.permute.xlu0 %592
        %594 = vrot.lane.b32.xlu0 %v528, 8
        %v595 = vpop.permute.xlu0 %594
        %596 = vrot.lane.b32.xlu0 %v531, 8
        %v597 = vpop.permute.xlu0 %596
        %598 = vrot.lane.b32.xlu0 %v533, 8
        %v599 = vpop.permute.xlu0 %598
        %600 = vrot.lane.b32.xlu0 %v536, 8
        %v601 = vpop.permute.xlu0 %600
        %602 = vrot.lane.b32.xlu0 %v538, 8
        %v603 = vpop.permute.xlu0 %602
        %604 = vrot.lane.b32.xlu0 %v541, 8
        %v605 = vpop.permute.xlu0 %604
        %606 = vrot.lane.b32.xlu0 %v543, 8
        %v607 = vpop.permute.xlu0 %606
        %642 = vrot.lane.b32.xlu0 %v187, 12
        %v643 = vpop.permute.xlu0 %642
        %644 = vrot.lane.b32.xlu0 %v188, 12
        %v645 = vpop.permute.xlu0 %644
        %646 = vrot.lane.b32.xlu0 %v190, 12
        %v647 = vpop.permute.xlu0 %646
        %648 = vrot.lane.b32.xlu0 %v191, 12
        %v649 = vpop.permute.xlu0 %648
        %650 = vrot.lane.b32.xlu0 %v193, 12
        %v651 = vpop.permute.xlu0 %650
        %652 = vrot.lane.b32.xlu0 %v194, 12
        %v653 = vpop.permute.xlu0 %652
        %654 = vrot.lane.b32.xlu0 %v196, 12
        %v655 = vpop.permute.xlu0 %654
        %656 = vrot.lane.b32.xlu0 %v197, 12
        %v657 = vpop.permute.xlu0 %656
        %658 = vrot.lane.b32.xlu0 %v199, 12
        %v659 = vpop.permute.xlu0 %658
        %660 = vrot.lane.b32.xlu0 %v200, 12
        %v661 = vpop.permute.xlu0 %660
        %662 = vrot.lane.b32.xlu0 %v202, 12
        %v663 = vpop.permute.xlu0 %662
        %664 = vrot.lane.b32.xlu0 %v203, 12
        %v665 = vpop.permute.xlu0 %664
        %666 = vrot.lane.b32.xlu0 %v205, 12
        %v667 = vpop.permute.xlu0 %666
        %668 = vrot.lane.b32.xlu0 %v206, 12
        %v669 = vpop.permute.xlu0 %668
        %670 = vrot.lane.b32.xlu0 %v208, 12
        %v671 = vpop.permute.xlu0 %670
        %672 = vrot.lane.b32.xlu0 %v209, 12
        %v673 = vpop.permute.xlu0 %672
        %674 = vrot.lane.b32.xlu0 %v211, 12
        %v675 = vpop.permute.xlu0 %674
        %676 = vrot.lane.b32.xlu0 %v212, 12
        %v677 = vpop.permute.xlu0 %676
        %678 = vrot.lane.b32.xlu0 %v214, 12
        %v679 = vpop.permute.xlu0 %678
        %680 = vrot.lane.b32.xlu0 %v215, 12
        %v681 = vpop.permute.xlu0 %680
        %682 = vrot.lane.b32.xlu0 %v217, 12
        %v683 = vpop.permute.xlu0 %682
        %684 = vrot.lane.b32.xlu0 %v218, 12
        %v685 = vpop.permute.xlu0 %684
        %686 = vrot.lane.b32.xlu0 %v220, 12
        %v687 = vpop.permute.xlu0 %686
        %688 = vrot.lane.b32.xlu0 %v221, 12
        %v689 = vpop.permute.xlu0 %688
        %690 = vrot.lane.b32.xlu0 %v223, 12
        %v691 = vpop.permute.xlu0 %690
        %692 = vrot.lane.b32.xlu0 %v224, 12
        %v693 = vpop.permute.xlu0 %692
        %694 = vrot.lane.b32.xlu0 %v226, 12
        %v695 = vpop.permute.xlu0 %694
        %696 = vrot.lane.b32.xlu0 %v227, 12
        %v697 = vpop.permute.xlu0 %696
        %698 = vrot.lane.b32.xlu0 %v229, 12
        %v699 = vpop.permute.xlu0 %698
        %700 = vrot.lane.b32.xlu0 %v230, 12
        %v701 = vpop.permute.xlu0 %700
        %702 = vrot.lane.b32.xlu0 %v232, 12
        %v703 = vpop.permute.xlu0 %702
        %704 = vrot.lane.b32.xlu0 %v233, 12
        %v705 = vpop.permute.xlu0 %704
        %v739 = vrot.slane %v232, 1
        %v740 = vrot.slane %v233, 1
        %v741 = vsel %vm286, %v739, %v740
        %v742 = vrot.slane %v234, 1
        %v743 = vsel %vm286, %v740, %v742
        %744 = vrot.lane.b32.xlu0 %v294, 16
        %v745 = vpop.permute.xlu0 %744
        %746 = vrot.lane.b32.xlu0 %v296, 16
        %v747 = vpop.permute.xlu0 %746
        %748 = vrot.lane.b32.xlu0 %v299, 16
        %v749 = vpop.permute.xlu0 %748
        %750 = vrot.lane.b32.xlu0 %v301, 16
        %v751 = vpop.permute.xlu0 %750
        %752 = vrot.lane.b32.xlu0 %v304, 16
        %v753 = vpop.permute.xlu0 %752
        %754 = vrot.lane.b32.xlu0 %v306, 16
        %v755 = vpop.permute.xlu0 %754
        %756 = vrot.lane.b32.xlu0 %v309, 16
        %v757 = vpop.permute.xlu0 %756
        %758 = vrot.lane.b32.xlu0 %v311, 16
        %v759 = vpop.permute.xlu0 %758
        %760 = vrot.lane.b32.xlu0 %v314, 16
        %v761 = vpop.permute.xlu0 %760
        %762 = vrot.lane.b32.xlu0 %v316, 16
        %v763 = vpop.permute.xlu0 %762
        %764 = vrot.lane.b32.xlu0 %v319, 16
        %v765 = vpop.permute.xlu0 %764
        %766 = vrot.lane.b32.xlu0 %v321, 16
        %v767 = vpop.permute.xlu0 %766
        %768 = vrot.lane.b32.xlu0 %v324, 16
        %v769 = vpop.permute.xlu0 %768
        %770 = vrot.lane.b32.xlu0 %v326, 16
        %v771 = vpop.permute.xlu0 %770
        %772 = vrot.lane.b32.xlu0 %v329, 16
        %v773 = vpop.permute.xlu0 %772
        %774 = vrot.lane.b32.xlu0 %v331, 16
        %v775 = vpop.permute.xlu0 %774
        %776 = vrot.lane.b32.xlu0 %v334, 16
        %v777 = vpop.permute.xlu0 %776
        %778 = vrot.lane.b32.xlu0 %v336, 16
        %v779 = vpop.permute.xlu0 %778
        %780 = vrot.lane.b32.xlu0 %v339, 16
        %v781 = vpop.permute.xlu0 %780
        %782 = vrot.lane.b32.xlu0 %v341, 16
        %v783 = vpop.permute.xlu0 %782
        %784 = vrot.lane.b32.xlu0 %v344, 16
        %v785 = vpop.permute.xlu0 %784
        %786 = vrot.lane.b32.xlu0 %v346, 16
        %v787 = vpop.permute.xlu0 %786
        %788 = vrot.lane.b32.xlu0 %v349, 16
        %v789 = vpop.permute.xlu0 %788
        %790 = vrot.lane.b32.xlu0 %v351, 16
        %v791 = vpop.permute.xlu0 %790
        %792 = vrot.lane.b32.xlu0 %v354, 16
        %v793 = vpop.permute.xlu0 %792
        %794 = vrot.lane.b32.xlu0 %v356, 16
        %v795 = vpop.permute.xlu0 %794
        %796 = vrot.lane.b32.xlu0 %v359, 16
        %v797 = vpop.permute.xlu0 %796
        %798 = vrot.lane.b32.xlu0 %v361, 16
        %v799 = vpop.permute.xlu0 %798
        %800 = vrot.lane.b32.xlu0 %v364, 16
        %v801 = vpop.permute.xlu0 %800
        %802 = vrot.lane.b32.xlu0 %v366, 16
        %v803 = vpop.permute.xlu0 %802
        %804 = vrot.lane.b32.xlu0 %v741, 16
        %v805 = vpop.permute.xlu0 %804
        %806 = vrot.lane.b32.xlu0 %v743, 16
        %v807 = vpop.permute.xlu0 %806
        %v840 = vrot.slane %v232, 2
        %v841 = vrot.slane %v233, 2
        %v842 = vsel %vm463, %v840, %v841
        %v843 = vrot.slane %v234, 2
        %v844 = vsel %vm463, %v841, %v843
        %845 = vrot.lane.b32.xlu0 %v471, 20
        %v846 = vpop.permute.xlu0 %845
        %847 = vrot.lane.b32.xlu0 %v473, 20
        %v848 = vpop.permute.xlu0 %847
        %849 = vrot.lane.b32.xlu0 %v476, 20
        %v850 = vpop.permute.xlu0 %849
        %851 = vrot.lane.b32.xlu0 %v478, 20
        %v852 = vpop.permute.xlu0 %851
        %853 = vrot.lane.b32.xlu0 %v481, 20
        %v854 = vpop.permute.xlu0 %853
        %855 = vrot.lane.b32.xlu0 %v483, 20
        %v856 = vpop.permute.xlu0 %855
        %857 = vrot.lane.b32.xlu0 %v486, 20
        %v858 = vpop.permute.xlu0 %857
        %859 = vrot.lane.b32.xlu0 %v488, 20
        %v860 = vpop.permute.xlu0 %859
        %861 = vrot.lane.b32.xlu0 %v491, 20
        %v862 = vpop.permute.xlu0 %861
        %863 = vrot.lane.b32.xlu0 %v493, 20
        %v864 = vpop.permute.xlu0 %863
        %865 = vrot.lane.b32.xlu0 %v496, 20
        %v866 = vpop.permute.xlu0 %865
        %867 = vrot.lane.b32.xlu0 %v498, 20
        %v868 = vpop.permute.xlu0 %867
        %869 = vrot.lane.b32.xlu0 %v501, 20
        %v870 = vpop.permute.xlu0 %869
        %871 = vrot.lane.b32.xlu0 %v503, 20
        %v872 = vpop.permute.xlu0 %871
        %873 = vrot.lane.b32.xlu0 %v506, 20
        %v874 = vpop.permute.xlu0 %873
        %875 = vrot.lane.b32.xlu0 %v508, 20
        %v876 = vpop.permute.xlu0 %875
        %877 = vrot.lane.b32.xlu0 %v511, 20
        %v878 = vpop.permute.xlu0 %877
        %879 = vrot.lane.b32.xlu0 %v513, 20
        %v880 = vpop.permute.xlu0 %879
        %881 = vrot.lane.b32.xlu0 %v516, 20
        %v882 = vpop.permute.xlu0 %881
        %883 = vrot.lane.b32.xlu0 %v518, 20
        %v884 = vpop.permute.xlu0 %883
        %885 = vrot.lane.b32.xlu0 %v521, 20
        %v886 = vpop.permute.xlu0 %885
        %887 = vrot.lane.b32.xlu0 %v523, 20
        %v888 = vpop.permute.xlu0 %887
        %889 = vrot.lane.b32.xlu0 %v526, 20
        %v890 = vpop.permute.xlu0 %889
        %891 = vrot.lane.b32.xlu0 %v528, 20
        %v892 = vpop.permute.xlu0 %891
        %893 = vrot.lane.b32.xlu0 %v531, 20
        %v894 = vpop.permute.xlu0 %893
        %895 = vrot.lane.b32.xlu0 %v533, 20
        %v896 = vpop.permute.xlu0 %895
        %897 = vrot.lane.b32.xlu0 %v536, 20
        %v898 = vpop.permute.xlu0 %897
        %899 = vrot.lane.b32.xlu0 %v538, 20
        %v900 = vpop.permute.xlu0 %899
        %901 = vrot.lane.b32.xlu0 %v541, 20
        %v902 = vpop.permute.xlu0 %901
        %903 = vrot.lane.b32.xlu0 %v543, 20
        %v904 = vpop.permute.xlu0 %903
        %905 = vrot.lane.b32.xlu0 %v842, 20
        %v906 = vpop.permute.xlu0 %905
        %907 = vrot.lane.b32.xlu0 %v844, 20
        %v908 = vpop.permute.xlu0 %907
        %943 = vrot.lane.b32.xlu0 %v190, 24
        %v944 = vpop.permute.xlu0 %943
        %945 = vrot.lane.b32.xlu0 %v191, 24
        %v946 = vpop.permute.xlu0 %945
        %947 = vrot.lane.b32.xlu0 %v193, 24
        %v948 = vpop.permute.xlu0 %947
        %949 = vrot.lane.b32.xlu0 %v194, 24
        %v950 = vpop.permute.xlu0 %949
        %951 = vrot.lane.b32.xlu0 %v196, 24
        %v952 = vpop.permute.xlu0 %951
        %953 = vrot.lane.b32.xlu0 %v197, 24
        %v954 = vpop.permute.xlu0 %953
        %955 = vrot.lane.b32.xlu0 %v199, 24
        %v956 = vpop.permute.xlu0 %955
        %957 = vrot.lane.b32.xlu0 %v200, 24
        %v958 = vpop.permute.xlu0 %957
        %959 = vrot.lane.b32.xlu0 %v202, 24
        %v960 = vpop.permute.xlu0 %959
        %961 = vrot.lane.b32.xlu0 %v203, 24
        %v962 = vpop.permute.xlu0 %961
        %963 = vrot.lane.b32.xlu0 %v205, 24
        %v964 = vpop.permute.xlu0 %963
        %965 = vrot.lane.b32.xlu0 %v206, 24
        %v966 = vpop.permute.xlu0 %965
        %967 = vrot.lane.b32.xlu0 %v208, 24
        %v968 = vpop.permute.xlu0 %967
        %969 = vrot.lane.b32.xlu0 %v209, 24
        %v970 = vpop.permute.xlu0 %969
        %971 = vrot.lane.b32.xlu0 %v211, 24
        %v972 = vpop.permute.xlu0 %971
        %973 = vrot.lane.b32.xlu0 %v212, 24
        %v974 = vpop.permute.xlu0 %973
        %975 = vrot.lane.b32.xlu0 %v214, 24
        %v976 = vpop.permute.xlu0 %975
        %977 = vrot.lane.b32.xlu0 %v215, 24
        %v978 = vpop.permute.xlu0 %977
        %979 = vrot.lane.b32.xlu0 %v217, 24
        %v980 = vpop.permute.xlu0 %979
        %981 = vrot.lane.b32.xlu0 %v218, 24
        %v982 = vpop.permute.xlu0 %981
        %983 = vrot.lane.b32.xlu0 %v220, 24
        %v984 = vpop.permute.xlu0 %983
        %985 = vrot.lane.b32.xlu0 %v221, 24
        %v986 = vpop.permute.xlu0 %985
        %987 = vrot.lane.b32.xlu0 %v223, 24
        %v988 = vpop.permute.xlu0 %987
        %989 = vrot.lane.b32.xlu0 %v224, 24
        %v990 = vpop.permute.xlu0 %989
        %991 = vrot.lane.b32.xlu0 %v226, 24
        %v992 = vpop.permute.xlu0 %991
        %993 = vrot.lane.b32.xlu0 %v227, 24
        %v994 = vpop.permute.xlu0 %993
        %995 = vrot.lane.b32.xlu0 %v229, 24
        %v996 = vpop.permute.xlu0 %995
        %997 = vrot.lane.b32.xlu0 %v230, 24
        %v998 = vpop.permute.xlu0 %997
        %999 = vrot.lane.b32.xlu0 %v232, 24
        %v1000 = vpop.permute.xlu0 %999
        %1001 = vrot.lane.b32.xlu0 %v233, 24
        %v1002 = vpop.permute.xlu0 %1001
        %1003 = vrot.lane.b32.xlu0 %v235, 24
        %v1004 = vpop.permute.xlu0 %1003
        %1005 = vrot.lane.b32.xlu0 %v236, 24
        %v1006 = vpop.permute.xlu0 %1005
        %v1040 = vrot.slane %v235, 1
        %v1041 = vrot.slane %v236, 1
        %v1042 = vsel %vm286, %v1040, %v1041
        %v1043 = vrot.slane %v237, 1
        %v1044 = vsel %vm286, %v1041, %v1043
        %1045 = vrot.lane.b32.xlu0 %v299, 28
        %v1046 = vpop.permute.xlu0 %1045
        %1047 = vrot.lane.b32.xlu0 %v301, 28
        %v1048 = vpop.permute.xlu0 %1047
        %1049 = vrot.lane.b32.xlu0 %v304, 28
        %v1050 = vpop.permute.xlu0 %1049
        %1051 = vrot.lane.b32.xlu0 %v306, 28
        %v1052 = vpop.permute.xlu0 %1051
        %1053 = vrot.lane.b32.xlu0 %v309, 28
        %v1054 = vpop.permute.xlu0 %1053
        %1055 = vrot.lane.b32.xlu0 %v311, 28
        %v1056 = vpop.permute.xlu0 %1055
        %1057 = vrot.lane.b32.xlu0 %v314, 28
        %v1058 = vpop.permute.xlu0 %1057
        %1059 = vrot.lane.b32.xlu0 %v316, 28
        %v1060 = vpop.permute.xlu0 %1059
        %1061 = vrot.lane.b32.xlu0 %v319, 28
        %v1062 = vpop.permute.xlu0 %1061
        %1063 = vrot.lane.b32.xlu0 %v321, 28
        %v1064 = vpop.permute.xlu0 %1063
        %1065 = vrot.lane.b32.xlu0 %v324, 28
        %v1066 = vpop.permute.xlu0 %1065
        %1067 = vrot.lane.b32.xlu0 %v326, 28
        %v1068 = vpop.permute.xlu0 %1067
        %1069 = vrot.lane.b32.xlu0 %v329, 28
        %v1070 = vpop.permute.xlu0 %1069
        %1071 = vrot.lane.b32.xlu0 %v331, 28
        %v1072 = vpop.permute.xlu0 %1071
        %1073 = vrot.lane.b32.xlu0 %v334, 28
        %v1074 = vpop.permute.xlu0 %1073
        %1075 = vrot.lane.b32.xlu0 %v336, 28
        %v1076 = vpop.permute.xlu0 %1075
        %1077 = vrot.lane.b32.xlu0 %v339, 28
        %v1078 = vpop.permute.xlu0 %1077
        %1079 = vrot.lane.b32.xlu0 %v341, 28
        %v1080 = vpop.permute.xlu0 %1079
        %1081 = vrot.lane.b32.xlu0 %v344, 28
        %v1082 = vpop.permute.xlu0 %1081
        %1083 = vrot.lane.b32.xlu0 %v346, 28
        %v1084 = vpop.permute.xlu0 %1083
        %1085 = vrot.lane.b32.xlu0 %v349, 28
        %v1086 = vpop.permute.xlu0 %1085
        %1087 = vrot.lane.b32.xlu0 %v351, 28
        %v1088 = vpop.permute.xlu0 %1087
        %1089 = vrot.lane.b32.xlu0 %v354, 28
        %v1090 = vpop.permute.xlu0 %1089
        %1091 = vrot.lane.b32.xlu0 %v356, 28
        %v1092 = vpop.permute.xlu0 %1091
        %1093 = vrot.lane.b32.xlu0 %v359, 28
        %v1094 = vpop.permute.xlu0 %1093
        %1095 = vrot.lane.b32.xlu0 %v361, 28
        %v1096 = vpop.permute.xlu0 %1095
        %1097 = vrot.lane.b32.xlu0 %v364, 28
        %v1098 = vpop.permute.xlu0 %1097
        %1099 = vrot.lane.b32.xlu0 %v366, 28
        %v1100 = vpop.permute.xlu0 %1099
        %1101 = vrot.lane.b32.xlu0 %v741, 28
        %v1102 = vpop.permute.xlu0 %1101
        %1103 = vrot.lane.b32.xlu0 %v743, 28
        %v1104 = vpop.permute.xlu0 %1103
        %1105 = vrot.lane.b32.xlu0 %v1042, 28
        %v1106 = vpop.permute.xlu0 %1105
        %1107 = vrot.lane.b32.xlu0 %v1044, 28
        %v1108 = vpop.permute.xlu0 %1107
        %v1141 = vrot.slane %v235, 2
        %v1142 = vrot.slane %v236, 2
        %v1143 = vsel %vm463, %v1141, %v1142
        %v1144 = vrot.slane %v237, 2
        %v1145 = vsel %vm463, %v1142, %v1144
        %1146 = vrot.lane.b32.xlu0 %v476, 32
        %v1147 = vpop.permute.xlu0 %1146
        %1148 = vrot.lane.b32.xlu0 %v478, 32
        %v1149 = vpop.permute.xlu0 %1148
        %1150 = vrot.lane.b32.xlu0 %v481, 32
        %v1151 = vpop.permute.xlu0 %1150
        %1152 = vrot.lane.b32.xlu0 %v483, 32
        %v1153 = vpop.permute.xlu0 %1152
        %1154 = vrot.lane.b32.xlu0 %v486, 32
        %v1155 = vpop.permute.xlu0 %1154
        %1156 = vrot.lane.b32.xlu0 %v488, 32
        %v1157 = vpop.permute.xlu0 %1156
        %1158 = vrot.lane.b32.xlu0 %v491, 32
        %v1159 = vpop.permute.xlu0 %1158
        %1160 = vrot.lane.b32.xlu0 %v493, 32
        %v1161 = vpop.permute.xlu0 %1160
        %1162 = vrot.lane.b32.xlu0 %v496, 32
        %v1163 = vpop.permute.xlu0 %1162
        %1164 = vrot.lane.b32.xlu0 %v498, 32
        %v1165 = vpop.permute.xlu0 %1164
        %1166 = vrot.lane.b32.xlu0 %v501, 32
        %v1167 = vpop.permute.xlu0 %1166
        %1168 = vrot.lane.b32.xlu0 %v503, 32
        %v1169 = vpop.permute.xlu0 %1168
        %1170 = vrot.lane.b32.xlu0 %v506, 32
        %v1171 = vpop.permute.xlu0 %1170
        %1172 = vrot.lane.b32.xlu0 %v508, 32
        %v1173 = vpop.permute.xlu0 %1172
        %1174 = vrot.lane.b32.xlu0 %v511, 32
        %v1175 = vpop.permute.xlu0 %1174
        %1176 = vrot.lane.b32.xlu0 %v513, 32
        %v1177 = vpop.permute.xlu0 %1176
        %1178 = vrot.lane.b32.xlu0 %v516, 32
        %v1179 = vpop.permute.xlu0 %1178
        %1180 = vrot.lane.b32.xlu0 %v518, 32
        %v1181 = vpop.permute.xlu0 %1180
        %1182 = vrot.lane.b32.xlu0 %v521, 32
        %v1183 = vpop.permute.xlu0 %1182
        %1184 = vrot.lane.b32.xlu0 %v523, 32
        %v1185 = vpop.permute.xlu0 %1184
        %1186 = vrot.lane.b32.xlu0 %v526, 32
        %v1187 = vpop.permute.xlu0 %1186
        %1188 = vrot.lane.b32.xlu0 %v528, 32
        %v1189 = vpop.permute.xlu0 %1188
        %1190 = vrot.lane.b32.xlu0 %v531, 32
        %v1191 = vpop.permute.xlu0 %1190
        %1192 = vrot.lane.b32.xlu0 %v533, 32
        %v1193 = vpop.permute.xlu0 %1192
        %1194 = vrot.lane.b32.xlu0 %v536, 32
        %v1195 = vpop.permute.xlu0 %1194
        %1196 = vrot.lane.b32.xlu0 %v538, 32
        %v1197 = vpop.permute.xlu0 %1196
        %1198 = vrot.lane.b32.xlu0 %v541, 32
        %v1199 = vpop.permute.xlu0 %1198
        %1200 = vrot.lane.b32.xlu0 %v543, 32
        %v1201 = vpop.permute.xlu0 %1200
        %1202 = vrot.lane.b32.xlu0 %v842, 32
        %v1203 = vpop.permute.xlu0 %1202
        %1204 = vrot.lane.b32.xlu0 %v844, 32
        %v1205 = vpop.permute.xlu0 %1204
        %1206 = vrot.lane.b32.xlu0 %v1143, 32
        %v1207 = vpop.permute.xlu0 %1206
        %1208 = vrot.lane.b32.xlu0 %v1145, 32
        %v1209 = vpop.permute.xlu0 %1208
        %vm1242 = vcmask 31744
        %v1243 = vsel %vm1242, %v184, %v368
        %v1244 = vsel %vm1242, %v185, %v370
        %v1245 = vsel %vm1242, %v187, %v372
        %v1246 = vsel %vm1242, %v188, %v374
        %v1247 = vsel %vm1242, %v190, %v376
        %v1248 = vsel %vm1242, %v191, %v378
        %v1249 = vsel %vm1242, %v193, %v380
        %v1250 = vsel %vm1242, %v194, %v382
        %v1251 = vsel %vm1242, %v196, %v384
        %v1252 = vsel %vm1242, %v197, %v386
        %v1253 = vsel %vm1242, %v199, %v388
        %v1254 = vsel %vm1242, %v200, %v390
        %v1255 = vsel %vm1242, %v202, %v392
        %v1256 = vsel %vm1242, %v203, %v394
        %v1257 = vsel %vm1242, %v205, %v396
        %v1258 = vsel %vm1242, %v206, %v398
        %v1259 = vsel %vm1242, %v208, %v400
        %v1260 = vsel %vm1242, %v209, %v402
        %v1261 = vsel %vm1242, %v211, %v404
        %v1262 = vsel %vm1242, %v212, %v406
        %v1263 = vsel %vm1242, %v214, %v408
        %v1264 = vsel %vm1242, %v215, %v410
        %v1265 = vsel %vm1242, %v217, %v412
        %v1266 = vsel %vm1242, %v218, %v414
        %v1267 = vsel %vm1242, %v220, %v416
        %v1268 = vsel %vm1242, %v221, %v418
        %v1269 = vsel %vm1242, %v223, %v420
        %v1270 = vsel %vm1242, %v224, %v422
        %v1271 = vsel %vm1242, %v226, %v424
        %v1272 = vsel %vm1242, %v227, %v426
        %v1273 = vsel %vm1242, %v229, %v428
        %v1274 = vsel %vm1242, %v230, %v430
        %vm1275 = vcmask 64512
        %v1276 = vsel %vm1275, %v1243, %v545
        %v1277 = vsel %vm1275, %v1244, %v547
        %v1278 = vsel %vm1275, %v1245, %v549
        %v1279 = vsel %vm1275, %v1246, %v551
        %v1280 = vsel %vm1275, %v1247, %v553
        %v1281 = vsel %vm1275, %v1248, %v555
        %v1282 = vsel %vm1275, %v1249, %v557
        %v1283 = vsel %vm1275, %v1250, %v559
        %v1284 = vsel %vm1275, %v1251, %v561
        %v1285 = vsel %vm1275, %v1252, %v563
        %v1286 = vsel %vm1275, %v1253, %v565
        %v1287 = vsel %vm1275, %v1254, %v567
        %v1288 = vsel %vm1275, %v1255, %v569
        %v1289 = vsel %vm1275, %v1256, %v571
        %v1290 = vsel %vm1275, %v1257, %v573
        %v1291 = vsel %vm1275, %v1258, %v575
        %v1292 = vsel %vm1275, %v1259, %v577
        %v1293 = vsel %vm1275, %v1260, %v579
        %v1294 = vsel %vm1275, %v1261, %v581
        %v1295 = vsel %vm1275, %v1262, %v583
        %v1296 = vsel %vm1275, %v1263, %v585
        %v1297 = vsel %vm1275, %v1264, %v587
        %v1298 = vsel %vm1275, %v1265, %v589
        %v1299 = vsel %vm1275, %v1266, %v591
        %v1300 = vsel %vm1275, %v1267, %v593
        %v1301 = vsel %vm1275, %v1268, %v595
        %v1302 = vsel %vm1275, %v1269, %v597
        %v1303 = vsel %vm1275, %v1270, %v599
        %v1304 = vsel %vm1275, %v1271, %v601
        %v1305 = vsel %vm1275, %v1272, %v603
        %v1306 = vsel %vm1275, %v1273, %v605
        %v1307 = vsel %vm1275, %v1274, %v607
        %vm1308 = vcmask 97280
        %v1309 = vsel %vm1308, %v1276, %v643
        %v1310 = vsel %vm1308, %v1277, %v645
        %v1311 = vsel %vm1308, %v1278, %v647
        %v1312 = vsel %vm1308, %v1279, %v649
        %v1313 = vsel %vm1308, %v1280, %v651
        %v1314 = vsel %vm1308, %v1281, %v653
        %v1315 = vsel %vm1308, %v1282, %v655
        %v1316 = vsel %vm1308, %v1283, %v657
        %v1317 = vsel %vm1308, %v1284, %v659
        %v1318 = vsel %vm1308, %v1285, %v661
        %v1319 = vsel %vm1308, %v1286, %v663
        %v1320 = vsel %vm1308, %v1287, %v665
        %v1321 = vsel %vm1308, %v1288, %v667
        %v1322 = vsel %vm1308, %v1289, %v669
        %v1323 = vsel %vm1308, %v1290, %v671
        %v1324 = vsel %vm1308, %v1291, %v673
        %v1325 = vsel %vm1308, %v1292, %v675
        %v1326 = vsel %vm1308, %v1293, %v677
        %v1327 = vsel %vm1308, %v1294, %v679
        %v1328 = vsel %vm1308, %v1295, %v681
        %v1329 = vsel %vm1308, %v1296, %v683
        %v1330 = vsel %vm1308, %v1297, %v685
        %v1331 = vsel %vm1308, %v1298, %v687
        %v1332 = vsel %vm1308, %v1299, %v689
        %v1333 = vsel %vm1308, %v1300, %v691
        %v1334 = vsel %vm1308, %v1301, %v693
        %v1335 = vsel %vm1308, %v1302, %v695
        %v1336 = vsel %vm1308, %v1303, %v697
        %v1337 = vsel %vm1308, %v1304, %v699
        %v1338 = vsel %vm1308, %v1305, %v701
        %v1339 = vsel %vm1308, %v1306, %v703
        %v1340 = vsel %vm1308, %v1307, %v705
        %vm1341 = vcmask 130048
        %v1342 = vsel %vm1341, %v1309, %v745
        %v1343 = vsel %vm1341, %v1310, %v747
        %v1344 = vsel %vm1341, %v1311, %v749
        %v1345 = vsel %vm1341, %v1312, %v751
        %v1346 = vsel %vm1341, %v1313, %v753
        %v1347 = vsel %vm1341, %v1314, %v755
        %v1348 = vsel %vm1341, %v1315, %v757
        %v1349 = vsel %vm1341, %v1316, %v759
        %v1350 = vsel %vm1341, %v1317, %v761
        %v1351 = vsel %vm1341, %v1318, %v763
        %v1352 = vsel %vm1341, %v1319, %v765
        %v1353 = vsel %vm1341, %v1320, %v767
        %v1354 = vsel %vm1341, %v1321, %v769
        %v1355 = vsel %vm1341, %v1322, %v771
        %v1356 = vsel %vm1341, %v1323, %v773
        %v1357 = vsel %vm1341, %v1324, %v775
        %v1358 = vsel %vm1341, %v1325, %v777
        %v1359 = vsel %vm1341, %v1326, %v779
        %v1360 = vsel %vm1341, %v1327, %v781
        %v1361 = vsel %vm1341, %v1328, %v783
        %v1362 = vsel %vm1341, %v1329, %v785
        %v1363 = vsel %vm1341, %v1330, %v787
        %v1364 = vsel %vm1341, %v1331, %v789
        %v1365 = vsel %vm1341, %v1332, %v791
        %v1366 = vsel %vm1341, %v1333, %v793
        %v1367 = vsel %vm1341, %v1334, %v795
        %v1368 = vsel %vm1341, %v1335, %v797
        %v1369 = vsel %vm1341, %v1336, %v799
        %v1370 = vsel %vm1341, %v1337, %v801
        %v1371 = vsel %vm1341, %v1338, %v803
        %v1372 = vsel %vm1341, %v1339, %v805
        %v1373 = vsel %vm1341, %v1340, %v807
        %vm1374 = vcmask 162816
        %v1375 = vsel %vm1374, %v1342, %v846
        %v1376 = vsel %vm1374, %v1343, %v848
        %v1377 = vsel %vm1374, %v1344, %v850
        %v1378 = vsel %vm1374, %v1345, %v852
        %v1379 = vsel %vm1374, %v1346, %v854
        %v1380 = vsel %vm1374, %v1347, %v856
        %v1381 = vsel %vm1374, %v1348, %v858
        %v1382 = vsel %vm1374, %v1349, %v860
        %v1383 = vsel %vm1374, %v1350, %v862
        %v1384 = vsel %vm1374, %v1351, %v864
        %v1385 = vsel %vm1374, %v1352, %v866
        %v1386 = vsel %vm1374, %v1353, %v868
        %v1387 = vsel %vm1374, %v1354, %v870
        %v1388 = vsel %vm1374, %v1355, %v872
        %v1389 = vsel %vm1374, %v1356, %v874
        %v1390 = vsel %vm1374, %v1357, %v876
        %v1391 = vsel %vm1374, %v1358, %v878
        %v1392 = vsel %vm1374, %v1359, %v880
        %v1393 = vsel %vm1374, %v1360, %v882
        %v1394 = vsel %vm1374, %v1361, %v884
        %v1395 = vsel %vm1374, %v1362, %v886
        %v1396 = vsel %vm1374, %v1363, %v888
        %v1397 = vsel %vm1374, %v1364, %v890
        %v1398 = vsel %vm1374, %v1365, %v892
        %v1399 = vsel %vm1374, %v1366, %v894
        %v1400 = vsel %vm1374, %v1367, %v896
        %v1401 = vsel %vm1374, %v1368, %v898
        %v1402 = vsel %vm1374, %v1369, %v900
        %v1403 = vsel %vm1374, %v1370, %v902
        %v1404 = vsel %vm1374, %v1371, %v904
        %v1405 = vsel %vm1374, %v1372, %v906
        %v1406 = vsel %vm1374, %v1373, %v908
        %vm1407 = vcmask 195584
        %v1408 = vsel %vm1407, %v1375, %v944
        %v1409 = vsel %vm1407, %v1376, %v946
        %v1410 = vsel %vm1407, %v1377, %v948
        %v1411 = vsel %vm1407, %v1378, %v950
        %v1412 = vsel %vm1407, %v1379, %v952
        %v1413 = vsel %vm1407, %v1380, %v954
        %v1414 = vsel %vm1407, %v1381, %v956
        %v1415 = vsel %vm1407, %v1382, %v958
        %v1416 = vsel %vm1407, %v1383, %v960
        %v1417 = vsel %vm1407, %v1384, %v962
        %v1418 = vsel %vm1407, %v1385, %v964
        %v1419 = vsel %vm1407, %v1386, %v966
        %v1420 = vsel %vm1407, %v1387, %v968
        %v1421 = vsel %vm1407, %v1388, %v970
        %v1422 = vsel %vm1407, %v1389, %v972
        %v1423 = vsel %vm1407, %v1390, %v974
        %v1424 = vsel %vm1407, %v1391, %v976
        %v1425 = vsel %vm1407, %v1392, %v978
        %v1426 = vsel %vm1407, %v1393, %v980
        %v1427 = vsel %vm1407, %v1394, %v982
        %v1428 = vsel %vm1407, %v1395, %v984
        %v1429 = vsel %vm1407, %v1396, %v986
        %v1430 = vsel %vm1407, %v1397, %v988
        %v1431 = vsel %vm1407, %v1398, %v990
        %v1432 = vsel %vm1407, %v1399, %v992
        %v1433 = vsel %vm1407, %v1400, %v994
        %v1434 = vsel %vm1407, %v1401, %v996
        %v1435 = vsel %vm1407, %v1402, %v998
        %v1436 = vsel %vm1407, %v1403, %v1000
        %v1437 = vsel %vm1407, %v1404, %v1002
        %v1438 = vsel %vm1407, %v1405, %v1004
        %v1439 = vsel %vm1407, %v1406, %v1006
        %vm1440 = vcmask 228352
        %v1441 = vsel %vm1440, %v1408, %v1046
        %v1442 = vsel %vm1440, %v1409, %v1048
        %v1443 = vsel %vm1440, %v1410, %v1050
        %v1444 = vsel %vm1440, %v1411, %v1052
        %v1445 = vsel %vm1440, %v1412, %v1054
        %v1446 = vsel %vm1440, %v1413, %v1056
        %v1447 = vsel %vm1440, %v1414, %v1058
        %v1448 = vsel %vm1440, %v1415, %v1060
        %v1449 = vsel %vm1440, %v1416, %v1062
        %v1450 = vsel %vm1440, %v1417, %v1064
        %v1451 = vsel %vm1440, %v1418, %v1066
        %v1452 = vsel %vm1440, %v1419, %v1068
        %v1453 = vsel %vm1440, %v1420, %v1070
        %v1454 = vsel %vm1440, %v1421, %v1072
        %v1455 = vsel %vm1440, %v1422, %v1074
        %v1456 = vsel %vm1440, %v1423, %v1076
        %v1457 = vsel %vm1440, %v1424, %v1078
        %v1458 = vsel %vm1440, %v1425, %v1080
        %v1459 = vsel %vm1440, %v1426, %v1082
        %v1460 = vsel %vm1440, %v1427, %v1084
        %v1461 = vsel %vm1440, %v1428, %v1086
        %v1462 = vsel %vm1440, %v1429, %v1088
        %v1463 = vsel %vm1440, %v1430, %v1090
        %v1464 = vsel %vm1440, %v1431, %v1092
        %v1465 = vsel %vm1440, %v1432, %v1094
        %v1466 = vsel %vm1440, %v1433, %v1096
        %v1467 = vsel %vm1440, %v1434, %v1098
        %v1468 = vsel %vm1440, %v1435, %v1100
        %v1469 = vsel %vm1440, %v1436, %v1102
        %v1470 = vsel %vm1440, %v1437, %v1104
        %v1471 = vsel %vm1440, %v1438, %v1106
        %v1472 = vsel %vm1440, %v1439, %v1108
        %vm1473 = vcmask 261120
        %v1474 = vsel %vm1473, %v1441, %v1147
        %v1475 = vsel %vm1473, %v1442, %v1149
        %v1476 = vsel %vm1473, %v1443, %v1151
        %v1477 = vsel %vm1473, %v1444, %v1153
        %v1478 = vsel %vm1473, %v1445, %v1155
        %v1479 = vsel %vm1473, %v1446, %v1157
        %v1480 = vsel %vm1473, %v1447, %v1159
        %v1481 = vsel %vm1473, %v1448, %v1161
        %v1482 = vsel %vm1473, %v1449, %v1163
        %v1483 = vsel %vm1473, %v1450, %v1165
        %v1484 = vsel %vm1473, %v1451, %v1167
        %v1485 = vsel %vm1473, %v1452, %v1169
        %v1486 = vsel %vm1473, %v1453, %v1171
        %v1487 = vsel %vm1473, %v1454, %v1173
        %v1488 = vsel %vm1473, %v1455, %v1175
        %v1489 = vsel %vm1473, %v1456, %v1177
        %v1490 = vsel %vm1473, %v1457, %v1179
        %v1491 = vsel %vm1473, %v1458, %v1181
        %v1492 = vsel %vm1473, %v1459, %v1183
        %v1493 = vsel %vm1473, %v1460, %v1185
        %v1494 = vsel %vm1473, %v1461, %v1187
        %v1495 = vsel %vm1473, %v1462, %v1189
        %v1496 = vsel %vm1473, %v1463, %v1191
        %v1497 = vsel %vm1473, %v1464, %v1193
        %v1498 = vsel %vm1473, %v1465, %v1195
        %v1499 = vsel %vm1473, %v1466, %v1197
        %v1500 = vsel %vm1473, %v1467, %v1199
        %v1501 = vsel %vm1473, %v1468, %v1201
        %v1502 = vsel %vm1473, %v1469, %v1203
        %v1503 = vsel %vm1473, %v1470, %v1205
        %v1504 = vsel %vm1473, %v1471, %v1207
        %v1505 = vsel %vm1473, %v1472, %v1209
        %v1506 = vld [vmem:[%s1] sm:$0xff]
        %v1507 = vld [vmem:[%s1 + $0x8] sm:$0xff]
        %v1508 = vld [vmem:[%s1 + $0x10] sm:$0xff]
        %v1509 = vld [vmem:[%s1 + $0x18] sm:$0xff]
        %v1510 = vld [vmem:[%s1 + $0x20] sm:$0xf]
        %v1511 = vld [vmem:[%s2] sm:$0x1]
        %v1513 = vlaneseq
        %v1514 = vshrl.u32 %v1513, 7
        %v1515 = vsub.s32 0, %v1514
        %v1516 = vrot.slane %v1511, %v1515
        %vm1518 = vcmask 293888
        %v1520 = vsel %vm1518, %v1474, 0
        %v1523 = vsel %vm1518, %v1475, 0
        %v1526 = vsel %vm1518, %v1476, 0
        %v1529 = vsel %vm1518, %v1477, 0
        %v1532 = vsel %vm1518, %v1478, 0
        %v1535 = vsel %vm1518, %v1479, 0
        %v1538 = vsel %vm1518, %v1480, 0
        %v1541 = vsel %vm1518, %v1481, 0
        %v1544 = vsel %vm1518, %v1482, 0
        %v1547 = vsel %vm1518, %v1483, 0
        %v1550 = vsel %vm1518, %v1484, 0
        %v1553 = vsel %vm1518, %v1485, 0
        %v1556 = vsel %vm1518, %v1486, 0
        %v1559 = vsel %vm1518, %v1487, 0
        %v1562 = vsel %vm1518, %v1488, 0
        %v1565 = vsel %vm1518, %v1489, 0
        %v1568 = vsel %vm1518, %v1490, 0
        %v1571 = vsel %vm1518, %v1491, 0
        %v1574 = vsel %vm1518, %v1492, 0
        %v1577 = vsel %vm1518, %v1493, 0
        %v1580 = vsel %vm1518, %v1494, 0
        %v1583 = vsel %vm1518, %v1495, 0
        %v1586 = vsel %vm1518, %v1496, 0
        %v1589 = vsel %vm1518, %v1497, 0
        %v1592 = vsel %vm1518, %v1498, 0
        %v1595 = vsel %vm1518, %v1499, 0
        %v1598 = vsel %vm1518, %v1500, 0
        %v1601 = vsel %vm1518, %v1501, 0
        %v1604 = vsel %vm1518, %v1502, 0
        %v1607 = vsel %vm1518, %v1503, 0
        %v1610 = vsel %vm1518, %v1504, 0
        %v1613 = vsel %vm1518, %v1505, 0
        %vm1615 = vcmask 1043456
        %v1617 = vsel %vm1615, %v1510, 0
        %1619 = vmatprep.subr.mxu0 0.0
        %1620 = vmatpush1.msra.mxu0 %v1506
        %1621 = vmatprep.subr.mxu0 0.0
        %1622 = vmatpush1.msra.mxu0 %v1507
        %1623 = vmatprep.subr.mxu0 0.0
        %1624 = vmatpush1.msra.mxu0 %v1508
        %1625 = vmatprep.subr.mxu0 0.0
        %1626 = vmatpush1.msra.mxu0 %v1509
        %1627 = vmatprep.subr.mxu0 0.0
        %1628 = vmatpush1.msra.mxu0 %v1617
        %1629 = vmatprep.subr.mxu0 0.0
        %1630 = vmatpush1.msra.mxu0 0.0
        %1631 = vmatprep.subr.mxu0 0.0
        %1632 = vmatpush1.msra.mxu0 0.0
        %1633 = vmatprep.subr.mxu0 0.0
        %1634 = vmatpush1.msra.mxu0 0.0
        %1635 = vmatprep.subr.mxu0 0.0
        %1636 = vmatpush1.msra.mxu0 0.0
        %1637 = vmatprep.subr.mxu0 0.0
        %1638 = vmatpush1.msra.mxu0 0.0
        %1639 = vmatprep.subr.mxu0 0.0
        %1640 = vmatpush1.msra.mxu0 0.0
        %1641 = vmatprep.subr.mxu0 0.0
        %1642 = vmatpush1.msra.mxu0 0.0
        %1643 = vmatprep.subr.mxu0 0.0
        %1644 = vmatpush1.msra.mxu0 0.0
        %1645 = vmatprep.subr.mxu0 0.0
        %1646 = vmatpush1.msra.mxu0 0.0
        %1647 = vmatprep.subr.mxu0 0.0
        %1648 = vmatpush1.msra.mxu0 0.0
        %1649 = vmatprep.subr.mxu0 0.0
        %1650 = vmatpush1.msra.mxu0 0.0
        %1651 = vmatprep.subr.mxu0 0.0
        %1652 = vmatpush1.msra.mxu0 0.0
        %1653 = vmatprep.subr.mxu0 0.0
        %1654 = vmatpush1.msra.mxu0 0.0
        %1655 = vmatprep.subr.mxu0 0.0
        %1656 = vmatpush1.msra.mxu0 0.0
        %1657 = vmatprep.subr.mxu0 0.0
        %1658 = vmatpush1.msra.mxu0 0.0
        %1659 = vmatprep.subr.mxu0 0.0
        %1660 = vmatpush1.msra.mxu0 0.0
        %1661 = vmatprep.subr.mxu0 0.0
        %1662 = vmatpush1.msra.mxu0 0.0
        %1663 = vmatprep.subr.mxu0 0.0
        %1664 = vmatpush1.msra.mxu0 0.0
        %1665 = vmatprep.subr.mxu0 0.0
        %1666 = vmatpush1.msra.mxu0 0.0
        %1667 = vmatprep.subr.mxu0 0.0
        %1668 = vmatpush1.msra.mxu0 0.0
        %1669 = vmatprep.subr.mxu0 0.0
        %1670 = vmatpush1.msra.mxu0 0.0
        %1671 = vmatprep.subr.mxu0 0.0
        %1672 = vmatpush1.msra.mxu0 0.0
        %1673 = vmatprep.subr.mxu0 0.0
        %1674 = vmatpush1.msra.mxu0 0.0
        %1675 = vmatprep.subr.mxu0 0.0
        %1676 = vmatpush1.msra.mxu0 0.0
        %1677 = vmatprep.subr.mxu0 0.0
        %1678 = vmatpush1.msra.mxu0 0.0
        %1679 = vmatprep.subr.mxu0 0.0
        %1680 = vmatpush1.msra.mxu0 0.0
        %1681 = vmatprep.subr.mxu0 0.0
        %1682 = vmatpush1.msra.mxu0 0.0
        %1683 = vmatprep.mubr.f32.mxu0 0.0
        %1684 = vmatmul.mubr.f32.gmra.mrb[0].mxu0 %v1520
        %v1685 = vpop.f32.mrb[0].mxu0
        %v1686 = vadd.f32 %v1516, %v1685
        %v1687 = vpop.f32.mrb[0].mxu0
        %1688 = vmatprep.mubr.f32.mxu0 0.0
        %1689 = vmatmul.mubr.f32.gmra.mrb[0].mxu0 %v1523
        %v1690 = vpop.f32.mrb[0].mxu0
        %v1691 = vadd.f32 %v1516, %v1690
        %v1692 = vpop.f32.mrb[0].mxu0
        %1693 = vmatprep.mubr.f32.mxu0 0.0
        %1694 = vmatmul.mubr.f32.gmra.mrb[0].mxu0 %v1526
        %v1695 = vpop.f32.mrb[0].mxu0
        %v1696 = vadd.f32 %v1516, %v1695
        %v1697 = vpop.f32.mrb[0].mxu0
        %1698 = vmatprep.mubr.f32.mxu0 0.0
        %1699 = vmatmul.mubr.f32.gmra.mrb[0].mxu0 %v1529
        %v1700 = vpop.f32.mrb[0].mxu0
        %v1701 = vadd.f32 %v1516, %v1700
        %v1702 = vpop.f32.mrb[0].mxu0
        %1703 = vmatprep.mubr.f32.mxu0 0.0
        %1704 = vmatmul.mubr.f32.gmra.mrb[0].mxu0 %v1532
        %v1705 = vpop.f32.mrb[0].mxu0
        %v1706 = vadd.f32 %v1516, %v1705
        %v1707 = vpop.f32.mrb[0].mxu0
        %1708 = vmatprep.mubr.f32.mxu0 0.0
        %1709 = vmatmul.mubr.f32.gmra.mrb[0].mxu0 %v1535
        %v1710 = vpop.f32.mrb[0].mxu0
        %v1711 = vadd.f32 %v1516, %v1710
        %v1712 = vpop.f32.mrb[0].mxu0
        %1713 = vmatprep.mubr.f32.mxu0 0.0
        %1714 = vmatmul.mubr.f32.gmra.mrb[0].mxu0 %v1538
        %v1715 = vpop.f32.mrb[0].mxu0
        %v1716 = vadd.f32 %v1516, %v1715
        %v1717 = vpop.f32.mrb[0].mxu0
        %1718 = vmatprep.mubr.f32.mxu0 0.0
        %1719 = vmatmul.mubr.f32.gmra.mrb[0].mxu0 %v1541
        %v1720 = vpop.f32.mrb[0].mxu0
        %v1721 = vadd.f32 %v1516, %v1720
        %v1722 = vpop.f32.mrb[0].mxu0
        %1723 = vmatprep.mubr.f32.mxu0 0.0
        %1724 = vmatmul.mubr.f32.gmra.mrb[0].mxu0 %v1544
        %v1725 = vpop.f32.mrb[0].mxu0
        %v1726 = vadd.f32 %v1516, %v1725
        %v1727 = vpop.f32.mrb[0].mxu0
        %1728 = vmatprep.mubr.f32.mxu0 0.0
        %1729 = vmatmul.mubr.f32.gmra.mrb[0].mxu0 %v1547
        %v1730 = vpop.f32.mrb[0].mxu0
        %v1731 = vadd.f32 %v1516, %v1730
        %v1732 = vpop.f32.mrb[0].mxu0
        %1733 = vmatprep.mubr.f32.mxu0 0.0
        %1734 = vmatmul.mubr.f32.gmra.mrb[0].mxu0 %v1550
        %v1735 = vpop.f32.mrb[0].mxu0
        %v1736 = vadd.f32 %v1516, %v1735
        %v1737 = vpop.f32.mrb[0].mxu0
        %1738 = vmatprep.mubr.f32.mxu0 0.0
        %1739 = vmatmul.mubr.f32.gmra.mrb[0].mxu0 %v1553
        %v1740 = vpop.f32.mrb[0].mxu0
        %v1741 = vadd.f32 %v1516, %v1740
        %v1742 = vpop.f32.mrb[0].mxu0
        %1743 = vmatprep.mubr.f32.mxu0 0.0
        %1744 = vmatmul.mubr.f32.gmra.mrb[0].mxu0 %v1556
        %v1745 = vpop.f32.mrb[0].mxu0
        %v1746 = vadd.f32 %v1516, %v1745
        %v1747 = vpop.f32.mrb[0].mxu0
        %1748 = vmatprep.mubr.f32.mxu0 0.0
        %1749 = vmatmul.mubr.f32.gmra.mrb[0].mxu0 %v1559
        %v1750 = vpop.f32.mrb[0].mxu0
        %v1751 = vadd.f32 %v1516, %v1750
        %v1752 = vpop.f32.mrb[0].mxu0
        %1753 = vmatprep.mubr.f32.mxu0 0.0
        %1754 = vmatmul.mubr.f32.gmra.mrb[0].mxu0 %v1562
        %v1755 = vpop.f32.mrb[0].mxu0
        %v1756 = vadd.f32 %v1516, %v1755
        %v1757 = vpop.f32.mrb[0].mxu0
        %1758 = vmatprep.mubr.f32.mxu0 0.0
        %1759 = vmatmul.mubr.f32.gmra.mrb[0].mxu0 %v1565
        %v1760 = vpop.f32.mrb[0].mxu0
        %v1761 = vadd.f32 %v1516, %v1760
        %v1762 = vpop.f32.mrb[0].mxu0
        %1763 = vmatprep.mubr.f32.mxu0 0.0
        %1764 = vmatmul.mubr.f32.gmra.mrb[0].mxu0 %v1568
        %v1765 = vpop.f32.mrb[0].mxu0
        %v1766 = vadd.f32 %v1516, %v1765
        %v1767 = vpop.f32.mrb[0].mxu0
        %1768 = vmatprep.mubr.f32.mxu0 0.0
        %1769 = vmatmul.mubr.f32.gmra.mrb[0].mxu0 %v1571
        %v1770 = vpop.f32.mrb[0].mxu0
        %v1771 = vadd.f32 %v1516, %v1770
        %v1772 = vpop.f32.mrb[0].mxu0
        %1773 = vmatprep.mubr.f32.mxu0 0.0
        %1774 = vmatmul.mubr.f32.gmra.mrb[0].mxu0 %v1574
        %v1775 = vpop.f32.mrb[0].mxu0
        %v1776 = vadd.f32 %v1516, %v1775
        %v1777 = vpop.f32.mrb[0].mxu0
        %1778 = vmatprep.mubr.f32.mxu0 0.0
        %1779 = vmatmul.mubr.f32.gmra.mrb[0].mxu0 %v1577
        %v1780 = vpop.f32.mrb[0].mxu0
        %v1781 = vadd.f32 %v1516, %v1780
        %v1782 = vpop.f32.mrb[0].mxu0
        %1783 = vmatprep.mubr.f32.mxu0 0.0
        %1784 = vmatmul.mubr.f32.gmra.mrb[0].mxu0 %v1580
        %v1785 = vpop.f32.mrb[0].mxu0
        %v1786 = vadd.f32 %v1516, %v1785
        %v1787 = vpop.f32.mrb[0].mxu0
        %1788 = vmatprep.mubr.f32.mxu0 0.0
        %1789 = vmatmul.mubr.f32.gmra.mrb[0].mxu0 %v1583
        %v1790 = vpop.f32.mrb[0].mxu0
        %v1791 = vadd.f32 %v1516, %v1790
        %v1792 = vpop.f32.mrb[0].mxu0
        %1793 = vmatprep.mubr.f32.mxu0 0.0
        %1794 = vmatmul.mubr.f32.gmra.mrb[0].mxu0 %v1586
        %v1795 = vpop.f32.mrb[0].mxu0
        %v1796 = vadd.f32 %v1516, %v1795
        %v1797 = vpop.f32.mrb[0].mxu0
        %1798 = vmatprep.mubr.f32.mxu0 0.0
        %1799 = vmatmul.mubr.f32.gmra.mrb[0].mxu0 %v1589
        %v1800 = vpop.f32.mrb[0].mxu0
        %v1801 = vadd.f32 %v1516, %v1800
        %v1802 = vpop.f32.mrb[0].mxu0
        %1803 = vmatprep.mubr.f32.mxu0 0.0
        %1804 = vmatmul.mubr.f32.gmra.mrb[0].mxu0 %v1592
        %v1805 = vpop.f32.mrb[0].mxu0
        %v1806 = vadd.f32 %v1516, %v1805
        %v1807 = vpop.f32.mrb[0].mxu0
        %1808 = vmatprep.mubr.f32.mxu0 0.0
        %1809 = vmatmul.mubr.f32.gmra.mrb[0].mxu0 %v1595
        %v1810 = vpop.f32.mrb[0].mxu0
        %v1811 = vadd.f32 %v1516, %v1810
        %v1812 = vpop.f32.mrb[0].mxu0
        %1813 = vmatprep.mubr.f32.mxu0 0.0
        %1814 = vmatmul.mubr.f32.gmra.mrb[0].mxu0 %v1598
        %v1815 = vpop.f32.mrb[0].mxu0
        %v1816 = vadd.f32 %v1516, %v1815
        %v1817 = vpop.f32.mrb[0].mxu0
        %1818 = vmatprep.mubr.f32.mxu0 0.0
        %1819 = vmatmul.mubr.f32.gmra.mrb[0].mxu0 %v1601
        %v1820 = vpop.f32.mrb[0].mxu0
        %v1821 = vadd.f32 %v1516, %v1820
        %v1822 = vpop.f32.mrb[0].mxu0
        %1823 = vmatprep.mubr.f32.mxu0 0.0
        %1824 = vmatmul.mubr.f32.gmra.mrb[0].mxu0 %v1604
        %v1825 = vpop.f32.mrb[0].mxu0
        %v1826 = vadd.f32 %v1516, %v1825
        %v1827 = vpop.f32.mrb[0].mxu0
        %1828 = vmatprep.mubr.f32.mxu0 0.0
        %1829 = vmatmul.mubr.f32.gmra.mrb[0].mxu0 %v1607
        %v1830 = vpop.f32.mrb[0].mxu0
        %v1831 = vadd.f32 %v1516, %v1830
        %v1832 = vpop.f32.mrb[0].mxu0
        %1833 = vmatprep.mubr.f32.mxu0 0.0
        %1834 = vmatmul.mubr.f32.gmra.mrb[0].mxu0 %v1610
        %v1835 = vpop.f32.mrb[0].mxu0
        %v1836 = vadd.f32 %v1516, %v1835
        %v1837 = vpop.f32.mrb[0].mxu0
        %1838 = vmatprep.mubr.f32.mxu0 0.0
        %1839 = vmatmul.mubr.f32.gmra.mrb[0].mxu0 %v1613
        %v1840 = vpop.f32.mrb[0].mxu0
        %v1841 = vadd.f32 %v1516, %v1840
        %v1842 = vpop.f32.mrb[0].mxu0
        %1843 = vdwg.mxu0
        %v1844 = vmax.f32 %v1686, 0.0
        %v1845 = vmax.f32 %v1691, 0.0
        %v1846 = vmax.f32 %v1696, 0.0
        %v1847 = vmax.f32 %v1701, 0.0
        %v1848 = vmax.f32 %v1706, 0.0
        %v1849 = vmax.f32 %v1711, 0.0
        %v1850 = vmax.f32 %v1716, 0.0
        %v1851 = vmax.f32 %v1721, 0.0
        %v1852 = vmax.f32 %v1726, 0.0
        %v1853 = vmax.f32 %v1731, 0.0
        %v1854 = vmax.f32 %v1736, 0.0
        %v1855 = vmax.f32 %v1741, 0.0
        %v1856 = vmax.f32 %v1746, 0.0
        %v1857 = vmax.f32 %v1751, 0.0
        %v1858 = vmax.f32 %v1756, 0.0
        %v1859 = vmax.f32 %v1761, 0.0
        %v1860 = vmax.f32 %v1766, 0.0
        %v1861 = vmax.f32 %v1771, 0.0
        %v1862 = vmax.f32 %v1776, 0.0
        %v1863 = vmax.f32 %v1781, 0.0
        %v1864 = vmax.f32 %v1786, 0.0
        %v1865 = vmax.f32 %v1791, 0.0
        %v1866 = vmax.f32 %v1796, 0.0
        %v1867 = vmax.f32 %v1801, 0.0
        %v1868 = vmax.f32 %v1806, 0.0
        %v1869 = vmax.f32 %v1811, 0.0
        %v1870 = vmax.f32 %v1816, 0.0
        %v1871 = vmax.f32 %v1821, 0.0
        %v1872 = vmax.f32 %v1826, 0.0
        %v1873 = vmax.f32 %v1831, 0.0
        %v1874 = vmax.f32 %v1836, 0.0
        %v1875 = vmax.f32 %v1841, 0.0
        %1876 = vst [vmem:[%s177] sm:$0xff] %v1844
        %1877 = vst [vmem:[%s177 + $0x8] sm:$0xff] %v1845
        %1878 = vst [vmem:[%s177 + $0x10] sm:$0xff] %v1846
        %1879 = vst [vmem:[%s177 + $0x18] sm:$0xff] %v1847
        %1880 = vst [vmem:[%s177 + $0x20] sm:$0xff] %v1848
        %1881 = vst [vmem:[%s177 + $0x28] sm:$0xff] %v1849
        %1882 = vst [vmem:[%s177 + $0x30] sm:$0xff] %v1850
        %1883 = vst [vmem:[%s177 + $0x38] sm:$0xff] %v1851
        %1884 = vst [vmem:[%s177 + $0x40] sm:$0xff] %v1852
        %1885 = vst [vmem:[%s177 + $0x48] sm:$0xff] %v1853
        %1886 = vst [vmem:[%s177 + $0x50] sm:$0xff] %v1854
        %1887 = vst [vmem:[%s177 + $0x58] sm:$0xff] %v1855
        %1888 = vst [vmem:[%s177 + $0x60] sm:$0xff] %v1856
        %1889 = vst [vmem:[%s177 + $0x68] sm:$0xff] %v1857
        %1890 = vst [vmem:[%s177 + $0x70] sm:$0xff] %v1858
        %1891 = vst [vmem:[%s177 + $0x78] sm:$0xff] %v1859
        %1892 = vst [vmem:[%s177 + $0x80] sm:$0xff] %v1860
        %1893 = vst [vmem:[%s177 + $0x88] sm:$0xff] %v1861
        %1894 = vst [vmem:[%s177 + $0x90] sm:$0xff] %v1862
        %1895 = vst [vmem:[%s177 + $0x98] sm:$0xff] %v1863
        %1896 = vst [vmem:[%s177 + $0xa0] sm:$0xff] %v1864
        %1897 = vst [vmem:[%s177 + $0xa8] sm:$0xff] %v1865
        %1898 = vst [vmem:[%s177 + $0xb0] sm:$0xff] %v1866
        %1899 = vst [vmem:[%s177 + $0xb8] sm:$0xff] %v1867
        %1900 = vst [vmem:[%s177 + $0xc0] sm:$0xff] %v1868
        %1901 = vst [vmem:[%s177 + $0xc8] sm:$0xff] %v1869
        %1902 = vst [vmem:[%s177 + $0xd0] sm:$0xff] %v1870
        %1903 = vst [vmem:[%s177 + $0xd8] sm:$0xff] %v1871
        %1904 = vst [vmem:[%s177 + $0xe0] sm:$0xff] %v1872
        %1905 = vst [vmem:[%s177 + $0xe8] sm:$0xff] %v1873
        %1906 = vst [vmem:[%s177 + $0xf0] sm:$0xff] %v1874
        %1907 = vst [vmem:[%s177 + $0xf8] sm:$0xff] %v1875
        %s1908 = sand.u32 %s107, 1
        %s1909 = scalar_lea.sflag [#allocation3], %s1908
        %s1910 = sand.u32 %s107, 1
        %s1911 = smul.addr %s1910, 256
        %s1912 = scalar_lea.vmem [#allocation2], %s1911
        // Predicated region
        $region33: #{tpu_custom_call.1} parent=31 // pred_check
          %p1913 = pneg %p117
        $region34: #{tpu_custom_call.1} parent=31 // pred_check_branch
          %1915 = sbr.rel (%p1913) target = $region36
        $region35: #{tpu_custom_call.1} parent=31 // pred_region
          %s1916 = smul.u32 16, %s22
          %s1918 = ssub.s32 4096, 4096
          %1919 = vsyncadd %s1909, %s1918
          %s1920 = smul.addr %s1916, 2
          %s1921 = smul.addr %s21, 32
          %s1922 = sadd.s32 %s1920, %s1921
          %s1923 = smul.addr %s1922, 128
          %s1924 = scalar_lea.hbm %s3, %s1923
          %s1925 = sshll.u32 %s1912, 4
          %s1926 = int_to_ptr.vmem [resolvable:$true] %s1925
          %1931 = dma.vmem_to_hbm [thread:$0]  %s1926, 4096, %s1924, %s1909, 128, 128, 8
        $region36: #{tpu_custom_call.1} parent=31 // pred_fallthru
          _
      $region32: #{tpu_custom_call.1} parent=5 // pred_fallthru
        _
      %p1932 = scmp.le.s32.totalorder 2, %s12
      // Predicated region
      $region37: #{tpu_custom_call.1} parent=5 // pred_check
        %p1933 = pneg %p1932
      $region38: #{tpu_custom_call.1} parent=5 // pred_check_branch
        %1935 = sbr.rel (%p1933) target = $region40
      $region39: #{tpu_custom_call.1} parent=5 // pred_region
        %s1936 = ssub.s32 %s12, 2
        // Predicated region
        $region41: #{tpu_custom_call.1} parent=39 // pred_check
          %p1937 = pneg %p123
        $region42: #{tpu_custom_call.1} parent=39 // pred_check_branch
          %1939 = sbr.rel (%p1937) target = $region44
        $region43: #{tpu_custom_call.1} parent=39 // pred_region
          %s1940 = sand.u32 %s108, 1
          %s1941 = scalar_lea.sflag [#allocation3], %s1940
          %s1942 = sand.u32 %s108, 1
          %s1943 = smul.addr %s1942, 256
          %s1944 = scalar_lea.vmem [#allocation2], %s1943
          %1945 = dma.done %s1941, 4096
        $region44: #{tpu_custom_call.1} parent=39 // pred_fallthru
          _
      $region40: #{tpu_custom_call.1} parent=5 // pred_fallthru
        _
    $region6: #{tpu_custom_call.1} parent=1 // loop_footer
      %s16 = sadd.s32 1, %s12
    $region7: #{tpu_custom_call.1} parent=1 // loop_footer_branch
      %11 = sbr.rel target = $region3
    $region8: #{tpu_custom_call.1} parent=1 // loop_exit
      _
    %1946 = vsyncpa [#allocation3], 1
    %s1947 = scalar_lea.sflag [#allocation3], 1
    %1948 = vsyncpa %s1947, 1

</llo_original>
